<compile_context>
chip_gen: v7x
topology: tpu7x:2x2x1
jax: 0.10.0
libtpu: 0.0.40
codegen_flags: <defaults>
</compile_context>

<pallas_src>
import jax
import jax.numpy as jnp
from jax import lax
from jax.experimental import pallas as pl
from jax.experimental.pallas import tpu as pltpu


def _round_up(x, m):
    return (x + m - 1) // m * m


def _vmem_tile_bytes(shape, itemsize):
    """Rough VMEM footprint of one buffer holding `shape` (lane/sublane padded)."""
    if len(shape) == 1:
        rows, cols = 1, shape[0]
    else:
        rows, cols = shape[-2], shape[-1]
    sublane = 8 * max(1, 4 // itemsize)          # 8 rows f32, 16 rows bf16
    lead = 1
    for d in shape[:-2]:
        lead *= int(d)
    return lead * _round_up(int(rows), sublane) * _round_up(int(cols), 128) * itemsize


def _make_critic_kernel(n_in, n_hidden):
    """kernel(in_0[, in_1], w0_0[, w0_1], b0, (w_i, b_i)*n_hidden, w_last_row, b_last, out)."""

    def critic_kernel(*refs):
        out_ref = refs[-1]
        in_refs = refs[:n_in]
        p = refs[n_in:-1]

        # ---- layer 0: one dot when the inputs were fused on the host, two
        # dots with the split first-layer weight otherwise (replaces the
        # PyTorch torch.cat).  Inputs are cast to bf16 in-kernel (no-op if
        # they already arrive bf16).
        acc = jnp.dot(in_refs[0][...].astype(jnp.bfloat16), p[0][...],
                      preferred_element_type=jnp.float32)
        for j in range(1, n_in):
            acc = acc + jnp.dot(in_refs[j][...].astype(jnp.bfloat16), p[j][...],
                                preferred_element_type=jnp.float32)
        h = jnp.maximum(acc + p[n_in][...], 0.0)

        # ---- hidden layers: bf16 MXU operands, f32 accumulate / bias / ReLU.
        idx = n_in + 1
        for _ in range(n_hidden):
            w = p[idx][...]
            b = p[idx + 1][...]
            idx += 2
            h = jnp.dot(h.astype(jnp.bfloat16), w,
                        preferred_element_type=jnp.float32) + b
            h = jnp.maximum(h, 0.0)

        # ---- final projection, emitted lane-dense:
        #   q_row (1, tm) = w_last (1, H) . h (tm, H)^T
        # expressed as a dot_general contracting the last dims of both operands
        # so the stored output block is a dense (1, tm) f32 row (no 128-lane
        # zero padding, no masked narrow stores).
        w_last = p[idx][...]          # (1, H)  bf16
        b_last = p[idx + 1][...]      # (1, 1)  f32
        q_row = lax.dot_general(
            w_last, h.astype(jnp.bfloat16),
            dimension_numbers=(((1,), (1,)), ((), ())),
            preferred_element_type=jnp.float32,
        )                              # (1, tm)
        out_ref[...] = q_row + b_last

    return critic_kernel


def critic_forward(state, action, params, *, tm=512):
    """state: (B, state_dim) f32, action: (B, action_dim) f32.

    params: list of (W, b) with W shape (in, out), b shape (1, out), f32
    (same math as PyTorch y = x @ W^T + b with W pre-transposed).
    Returns Q-values of shape (B, 1), f32.
    """
    batch, state_dim = state.shape
    action_dim = action.shape[1]
    n_layers = len(params)

    w0, b0 = params[0]
    hidden_dim = w0.shape[1]
    w_last, b_last = params[-1]

    # ---- first layer: fuse the two dots when the concat width fits one lane
    # tile (<=128); otherwise keep the concat-free split-weight path.
    fuse_first = (state_dim + action_dim) <= 128
    if fuse_first:
        inputs = [jnp.concatenate(
            [state.astype(jnp.bfloat16), action.astype(jnp.bfloat16)], axis=1)]
        first_ws = [w0.astype(jnp.bfloat16)]
    else:
        inputs = [state, action]                      # cast to bf16 inside kernel
        first_ws = [w0[:state_dim].astype(jnp.bfloat16),
                    w0[state_dim:].astype(jnp.bfloat16)]

    kernel_params = list(first_ws) + [b0.astype(jnp.float32)]
    for w, b in params[1:-1]:
        kernel_params.append(w.astype(jnp.bfloat16))
        kernel_params.append(b.astype(jnp.float32))
    kernel_params.append(w_last.astype(jnp.bfloat16).T.reshape(1, hidden_dim))
    kernel_params.append(b_last.astype(jnp.float32).reshape(1, 1))

    # ---- batch tiling: large lane-aligned tiles, no host-side zero padding
    # of state/action (edge blocks read past the array; those rows are
    # discarded by the final slice).
    tm = max(128, min(tm, _round_up(batch, 128)))
    tm = _round_up(tm, 128)
    grid_m = pl.cdiv(batch, tm)
    b_tot = grid_m * tm                                # only the output is over-allocated

    data_specs = [pl.BlockSpec((tm, inp.shape[1]), lambda i: (i, 0)) for inp in inputs]
    out_spec = pl.BlockSpec((1, tm), lambda i: (0, i))
    resident = lambda i: (0, 0)                        # weights/biases stay VMEM-resident

    kernel = _make_critic_kernel(len(inputs), n_layers - 2)

    # ---- cost hint.
    flops = 2 * b_tot * ((state_dim + action_dim) * hidden_dim
                         + hidden_dim * hidden_dim * max(0, n_layers - 2)
                         + hidden_dim)
    weight_bytes = sum(int(p.size) * p.dtype.itemsize for p in kernel_params)
    in_bytes = sum(int(x.size) * x.dtype.itemsize for x in inputs)
    cost = pl.CostEstimate(flops=flops, transcendentals=0,
                           bytes_accessed=in_bytes + weight_bytes + b_tot * 4)

    # ---- VMEM budget with lane/sublane padding + live activation temporaries.
    def footprint(param_bufs):
        total = 0
        for inp in inputs:
            total += 2 * _vmem_tile_bytes((tm, inp.shape[1]), inp.dtype.itemsize)
        for p in kernel_params:
            total += param_bufs * _vmem_tile_bytes(p.shape, p.dtype.itemsize)
        total += 2 * _vmem_tile_bytes((1, tm), 4)                       # output rows
        total += 3 * _vmem_tile_bytes((tm, hidden_dim), 4)              # f32 activations
        total += _vmem_tile_bytes((tm, state_dim + action_dim), 2)      # bf16 input cast
        return total

    def build(param_pipeline_mode, param_bufs):
        if param_pipeline_mode is None:
            param_specs = [pl.BlockSpec(p.shape, resident) for p in kernel_params]
        else:
            param_specs = [pl.BlockSpec(p.shape, resident,
                                        pipeline_mode=param_pipeline_mode)
                           for p in kernel_params]
        vmem_limit = int(min(64 * 1024 * 1024,
                             max(32 * 1024 * 1024, 2 * footprint(param_bufs))))
        return pl.pallas_call(
            kernel,
            out_shape=jax.ShapeDtypeStruct((1, b_tot), jnp.float32),
            grid=(grid_m,),
            in_specs=data_specs + param_specs,
            out_specs=out_spec,
            compiler_params=pltpu.CompilerParams(
                dimension_semantics=("parallel",),
                vmem_limit_bytes=vmem_limit),
            cost_estimate=cost,
        )

    try:
        # Resident params (constant index_map) only need a single buffer.
        out = build(pl.Buffered(1), 1)(*inputs, *kernel_params)
    except Exception:
        # TODO(synk): pl.Buffered(1) not accepted by this jax version; fall
        # back to default double-buffered resident params.
        out = build(None, 2)(*inputs, *kernel_params)

    return out.reshape(b_tot, 1)[:batch]


def init_critic_params(key, state_dim, action_dim, hidden_dim, num_layers):
    """Deterministic synthetic parameters (shapes match the PyTorch module)."""
    dims = [state_dim + action_dim] + [hidden_dim] * (num_layers - 1) + [1]
    params = []
    for i in range(len(dims) - 1):
        key, wk, bk = jax.random.split(key, 3)
        fan_in = dims[i]
        scale = 1.0 / jnp.sqrt(jnp.float32(fan_in))
        w = jax.random.uniform(wk, (dims[i], dims[i + 1]), jnp.float32, -scale, scale)
        b = jax.random.uniform(bk, (1, dims[i + 1]), jnp.float32, -scale, scale)
        params.append((w, b))
    return params


def _reference_forward_f32(state, action, params):
    """Exact PyTorch-equivalent f32 reference."""
    h = jnp.concatenate([state, action], axis=1)
    n = len(params)
    for i, (w, b) in enumerate(params):
        h = h @ w + b
        if i < n - 1:
            h = jnp.maximum(h, 0.0)
    return h


def _reference_forward_bf16(state, action, params):
    """Mimics the kernel's mixed precision (bf16 operands, f32 accumulate)."""
    h = jnp.concatenate([state, action], axis=1)
    n = len(params)
    for i, (w, b) in enumerate(params):
        h = jnp.dot(h.astype(jnp.bfloat16), w.astype(jnp.bfloat16),
                    preferred_element_type=jnp.float32) + b
        if i < n - 1:
            h = jnp.maximum(h, 0.0)
    return h


if __name__ == "__main__":
    # batch deliberately NOT a multiple of the tile -> exercises the unpadded
    # edge-block path (overhanging rows are discarded by the final slice).
    batch = 384
    state_dim = 16
    action_dim = 8
    hidden_dim = 32
    num_layers = 3       # Linear+ReLU, Linear+ReLU, Linear -> 1

    key = jax.random.PRNGKey(0)
    key, sk, ak = jax.random.split(key, 3)
    state = jax.random.normal(sk, (batch, state_dim), jnp.float32)
    action = jax.random.normal(ak, (batch, action_dim), jnp.float32)

    params = init_critic_params(key, state_dim, action_dim, hidden_dim, num_layers)

    q = critic_forward(state, action, params, tm=256)   # grid = 2 batch tiles
    q = jax.block_until_ready(q)
    assert q.shape == (batch, 1)

    # Tight check against a reference using the same mixed precision.
    q_bf16 = _reference_forward_bf16(state, action, params)
    assert jnp.allclose(q, q_bf16, atol=1e-2, rtol=1e-2), float(
        jnp.max(jnp.abs(q - q_bf16)))

    # Loose check against the exact f32 PyTorch semantics.
    q_f32 = _reference_forward_f32(state, action, params)
    assert jnp.allclose(q, q_f32, atol=5e-2, rtol=5e-2), float(
        jnp.max(jnp.abs(q - q_f32)))

    print("KERNEL_OK")
</pallas_src>

<mosaic_0001>
module attributes {stable_mosaic.version = 11 : i64} {
  func.func @critic_kernel(%arg0: i32, %arg1: memref<256x24xbf16, #tpu.memory_space<vmem>>, %arg2: memref<24x32xbf16, #tpu.memory_space<vmem>>, %arg3: memref<1x32xf32, #tpu.memory_space<vmem>>, %arg4: memref<32x32xbf16, #tpu.memory_space<vmem>>, %arg5: memref<1x32xf32, #tpu.memory_space<vmem>>, %arg6: memref<1x32xbf16, #tpu.memory_space<vmem>>, %arg7: memref<1x1xf32, #tpu.memory_space<vmem>>, %arg8: memref<1x256xf32, #tpu.memory_space<vmem>>) attributes {dimension_semantics = [#tpu.dimension_semantics<parallel>], iteration_bounds = array<i64: 2>, scalar_prefetch = 0 : i64, scratch_operands = 0 : i64, tpu.core_type = #tpu.core_type<tc>, window_params = [{transform_indices = @transform_0, window_bounds = array<i64: 256, 24>}, {pipeline_mode = #tpu.pipeline_mode<synchronous>, transform_indices = @transform_1, window_bounds = array<i64: 24, 32>}, {pipeline_mode = #tpu.pipeline_mode<synchronous>, transform_indices = @transform_2, window_bounds = array<i64: 1, 32>}, {pipeline_mode = #tpu.pipeline_mode<synchronous>, transform_indices = @transform_3, window_bounds = array<i64: 32, 32>}, {pipeline_mode = #tpu.pipeline_mode<synchronous>, transform_indices = @transform_4, window_bounds = array<i64: 1, 32>}, {pipeline_mode = #tpu.pipeline_mode<synchronous>, transform_indices = @transform_5, window_bounds = array<i64: 1, 32>}, {pipeline_mode = #tpu.pipeline_mode<synchronous>, transform_indices = @transform_6, window_bounds = array<i64: 1, 1>}, {transform_indices = @transform_7, window_bounds = array<i64: 1, 256>}]} {
    %c0 = arith.constant 0 : index
    %c0_0 = arith.constant 0 : index
    %0 = vector.load %arg1[%c0, %c0_0] : memref<256x24xbf16, #tpu.memory_space<vmem>>, vector<256x24xbf16>
    %c0_1 = arith.constant 0 : index
    %c0_2 = arith.constant 0 : index
    %1 = vector.load %arg2[%c0_1, %c0_2] : memref<24x32xbf16, #tpu.memory_space<vmem>>, vector<24x32xbf16>
    %cst = arith.constant dense<0.000000e+00> : vector<256x32xf32>
    %2 = tpu.matmul %0, %1, %cst {dimension_numbers = #tpu.dot_dimension_numbers<[1], [0], [0], [1], [0, 0, 1, 1], [], []>} : vector<256x24xbf16>, vector<24x32xbf16>, vector<256x32xf32> -> vector<256x32xf32>
    %c0_3 = arith.constant 0 : index
    %c0_4 = arith.constant 0 : index
    %3 = vector.load %arg3[%c0_3, %c0_4] : memref<1x32xf32, #tpu.memory_space<vmem>>, vector<1x32xf32>
    %4 = vector.broadcast %3 : vector<1x32xf32> to vector<256x32xf32>
    %5 = arith.addf %2, %4 : vector<256x32xf32>
    %cst_5 = arith.constant 0.000000e+00 : f32
    %6 = vector.broadcast %cst_5 : f32 to vector<256x32xf32>
    %7 = arith.maximumf %5, %6 : vector<256x32xf32>
    %c0_6 = arith.constant 0 : index
    %c0_7 = arith.constant 0 : index
    %8 = vector.load %arg4[%c0_6, %c0_7] : memref<32x32xbf16, #tpu.memory_space<vmem>>, vector<32x32xbf16>
    %c0_8 = arith.constant 0 : index
    %c0_9 = arith.constant 0 : index
    %9 = vector.load %arg5[%c0_8, %c0_9] : memref<1x32xf32, #tpu.memory_space<vmem>>, vector<1x32xf32>
    %10 = arith.truncf %7 : vector<256x32xf32> to vector<256x32xbf16>
    %cst_10 = arith.constant dense<0.000000e+00> : vector<256x32xf32>
    %11 = tpu.matmul %10, %8, %cst_10 {dimension_numbers = #tpu.dot_dimension_numbers<[1], [0], [0], [1], [0, 0, 1, 1], [], []>} : vector<256x32xbf16>, vector<32x32xbf16>, vector<256x32xf32> -> vector<256x32xf32>
    %12 = vector.broadcast %9 : vector<1x32xf32> to vector<256x32xf32>
    %13 = arith.addf %11, %12 : vector<256x32xf32>
    %cst_11 = arith.constant 0.000000e+00 : f32
    %14 = vector.broadcast %cst_11 : f32 to vector<256x32xf32>
    %15 = arith.maximumf %13, %14 : vector<256x32xf32>
    %c0_12 = arith.constant 0 : index
    %c0_13 = arith.constant 0 : index
    %16 = vector.load %arg6[%c0_12, %c0_13] : memref<1x32xbf16, #tpu.memory_space<vmem>>, vector<1x32xbf16>
    %c0_14 = arith.constant 0 : index
    %c0_15 = arith.constant 0 : index
    %17 = vector.load %arg7[%c0_14, %c0_15] : memref<1x1xf32, #tpu.memory_space<vmem>>, vector<1x1xf32>
    %18 = arith.truncf %15 : vector<256x32xf32> to vector<256x32xbf16>
    %cst_16 = arith.constant dense<0.000000e+00> : vector<1x256xf32>
    %19 = tpu.matmul %16, %18, %cst_16 {dimension_numbers = #tpu.dot_dimension_numbers<[1], [1], [0], [0], [0, 0, 1, 0], [], []>} : vector<1x32xbf16>, vector<256x32xbf16>, vector<1x256xf32> -> vector<1x256xf32>
    %20 = vector.broadcast %17 : vector<1x1xf32> to vector<1x256xf32>
    %21 = arith.addf %19, %20 : vector<1x256xf32>
    %c0_17 = arith.constant 0 : index
    %c0_18 = arith.constant 0 : index
    %22 = vector.load %arg8[%c0_17, %c0_18] : memref<1x256xf32, #tpu.memory_space<vmem>>, vector<1x256xf32>
    tpu.vector_store %arg8[%c0_17, %c0_18], %21 {strides = array<i32>} : memref<1x256xf32, #tpu.memory_space<vmem>>, vector<1x256xf32>,
    return
  }
  func.func @transform_0(%arg0: i32) -> (i32, i32) {
    %c0_i32 = arith.constant 0 : i32
    %c0_i32_0 = arith.constant 0 : i32
    return %arg0, %c0_i32 : i32, i32
  }
  func.func @transform_1(%arg0: i32) -> (i32, i32) {
    %c0_i32 = arith.constant 0 : i32
    %c0_i32_0 = arith.constant 0 : i32
    %c0_i32_1 = arith.constant 0 : i32
    return %c0_i32, %c0_i32_0 : i32, i32
  }
  func.func @transform_2(%arg0: i32) -> (i32, i32) {
    %c0_i32 = arith.constant 0 : i32
    %c0_i32_0 = arith.constant 0 : i32
    %c0_i32_1 = arith.constant 0 : i32
    return %c0_i32, %c0_i32_0 : i32, i32
  }
  func.func @transform_3(%arg0: i32) -> (i32, i32) {
    %c0_i32 = arith.constant 0 : i32
    %c0_i32_0 = arith.constant 0 : i32
    %c0_i32_1 = arith.constant 0 : i32
    return %c0_i32, %c0_i32_0 : i32, i32
  }
  func.func @transform_4(%arg0: i32) -> (i32, i32) {
    %c0_i32 = arith.constant 0 : i32
    %c0_i32_0 = arith.constant 0 : i32
    %c0_i32_1 = arith.constant 0 : i32
    return %c0_i32, %c0_i32_0 : i32, i32
  }
  func.func @transform_5(%arg0: i32) -> (i32, i32) {
    %c0_i32 = arith.constant 0 : i32
    %c0_i32_0 = arith.constant 0 : i32
    %c0_i32_1 = arith.constant 0 : i32
    return %c0_i32, %c0_i32_0 : i32, i32
  }
  func.func @transform_6(%arg0: i32) -> (i32, i32) {
    %c0_i32 = arith.constant 0 : i32
    %c0_i32_0 = arith.constant 0 : i32
    %c0_i32_1 = arith.constant 0 : i32
    return %c0_i32, %c0_i32_0 : i32, i32
  }
  func.func @transform_7(%arg0: i32) -> (i32, i32) {
    %c0_i32 = arith.constant 0 : i32
    %c0_i32_0 = arith.constant 0 : i32
    return %c0_i32, %arg0 : i32, i32
  }
}

module attributes {stable_mosaic.version = 11 : i64} {
  func.func @critic_kernel(%arg0: i32, %arg1: memref<256x24xbf16, #tpu.memory_space<vmem>>, %arg2: memref<24x32xbf16, #tpu.memory_space<vmem>>, %arg3: memref<1x32xf32, #tpu.memory_space<vmem>>, %arg4: memref<32x32xbf16, #tpu.memory_space<vmem>>, %arg5: memref<1x32xf32, #tpu.memory_space<vmem>>, %arg6: memref<1x32xbf16, #tpu.memory_space<vmem>>, %arg7: memref<1x1xf32, #tpu.memory_space<vmem>>, %arg8: memref<1x256xf32, #tpu.memory_space<vmem>>) attributes {dimension_semantics = [#tpu.dimension_semantics<parallel>], iteration_bounds = array<i64: 2>, scalar_prefetch = 0 : i64, scratch_operands = 0 : i64, tpu.core_type = #tpu.core_type<tc>, window_params = [{transform_indices = @transform_0, window_bounds = array<i64: 256, 24>}, {pipeline_mode = #tpu.pipeline_mode<synchronous>, transform_indices = @transform_1, window_bounds = array<i64: 24, 32>}, {pipeline_mode = #tpu.pipeline_mode<synchronous>, transform_indices = @transform_2, window_bounds = array<i64: 1, 32>}, {pipeline_mode = #tpu.pipeline_mode<synchronous>, transform_indices = @transform_3, window_bounds = array<i64: 32, 32>}, {pipeline_mode = #tpu.pipeline_mode<synchronous>, transform_indices = @transform_4, window_bounds = array<i64: 1, 32>}, {pipeline_mode = #tpu.pipeline_mode<synchronous>, transform_indices = @transform_5, window_bounds = array<i64: 1, 32>}, {pipeline_mode = #tpu.pipeline_mode<synchronous>, transform_indices = @transform_6, window_bounds = array<i64: 1, 1>}, {transform_indices = @transform_7, window_bounds = array<i64: 1, 256>}]} {
    %c0 = arith.constant 0 : index
    %c0_0 = arith.constant 0 : index
    %0 = vector.load %arg1[%c0, %c0_0] : memref<256x24xbf16, #tpu.memory_space<vmem>>, vector<256x24xbf16>
    %c0_1 = arith.constant 0 : index
    %c0_2 = arith.constant 0 : index
    %1 = vector.load %arg2[%c0_1, %c0_2] : memref<24x32xbf16, #tpu.memory_space<vmem>>, vector<24x32xbf16>
    %cst = arith.constant dense<0.000000e+00> : vector<256x32xf32>
    %2 = tpu.matmul %0, %1, %cst {dimension_numbers = #tpu.dot_dimension_numbers<[1], [0], [0], [1], [0, 0, 1, 1], [], []>} : vector<256x24xbf16>, vector<24x32xbf16>, vector<256x32xf32> -> vector<256x32xf32>
    %c0_3 = arith.constant 0 : index
    %c0_4 = arith.constant 0 : index
    %3 = vector.load %arg3[%c0_3, %c0_4] : memref<1x32xf32, #tpu.memory_space<vmem>>, vector<1x32xf32>
    %4 = vector.broadcast %3 : vector<1x32xf32> to vector<256x32xf32>
    %5 = arith.addf %2, %4 : vector<256x32xf32>
    %cst_5 = arith.constant 0.000000e+00 : f32
    %6 = vector.broadcast %cst_5 : f32 to vector<256x32xf32>
    %7 = arith.maximumf %5, %6 : vector<256x32xf32>
    %c0_6 = arith.constant 0 : index
    %c0_7 = arith.constant 0 : index
    %8 = vector.load %arg4[%c0_6, %c0_7] : memref<32x32xbf16, #tpu.memory_space<vmem>>, vector<32x32xbf16>
    %c0_8 = arith.constant 0 : index
    %c0_9 = arith.constant 0 : index
    %9 = vector.load %arg5[%c0_8, %c0_9] : memref<1x32xf32, #tpu.memory_space<vmem>>, vector<1x32xf32>
    %10 = arith.truncf %7 : vector<256x32xf32> to vector<256x32xbf16>
    %cst_10 = arith.constant dense<0.000000e+00> : vector<256x32xf32>
    %11 = tpu.matmul %10, %8, %cst_10 {dimension_numbers = #tpu.dot_dimension_numbers<[1], [0], [0], [1], [0, 0, 1, 1], [], []>} : vector<256x32xbf16>, vector<32x32xbf16>, vector<256x32xf32> -> vector<256x32xf32>
    %12 = vector.broadcast %9 : vector<1x32xf32> to vector<256x32xf32>
    %13 = arith.addf %11, %12 : vector<256x32xf32>
    %cst_11 = arith.constant 0.000000e+00 : f32
    %14 = vector.broadcast %cst_11 : f32 to vector<256x32xf32>
    %15 = arith.maximumf %13, %14 : vector<256x32xf32>
    %c0_12 = arith.constant 0 : index
    %c0_13 = arith.constant 0 : index
    %16 = vector.load %arg6[%c0_12, %c0_13] : memref<1x32xbf16, #tpu.memory_space<vmem>>, vector<1x32xbf16>
    %c0_14 = arith.constant 0 : index
    %c0_15 = arith.constant 0 : index
    %17 = vector.load %arg7[%c0_14, %c0_15] : memref<1x1xf32, #tpu.memory_space<vmem>>, vector<1x1xf32>
    %18 = arith.truncf %15 : vector<256x32xf32> to vector<256x32xbf16>
    %cst_16 = arith.constant dense<0.000000e+00> : vector<1x256xf32>
    %19 = tpu.matmul %16, %18, %cst_16 {dimension_numbers = #tpu.dot_dimension_numbers<[1], [1], [0], [0], [0, 0, 1, 0], [], []>} : vector<1x32xbf16>, vector<256x32xbf16>, vector<1x256xf32> -> vector<1x256xf32>
    %20 = vector.broadcast %17 : vector<1x1xf32> to vector<1x256xf32>
    %21 = arith.addf %19, %20 : vector<1x256xf32>
    %c0_17 = arith.constant 0 : index
    %c0_18 = arith.constant 0 : index
    %22 = vector.load %arg8[%c0_17, %c0_18] : memref<1x256xf32, #tpu.memory_space<vmem>>, vector<1x256xf32>
    tpu.vector_store %arg8[%c0_17, %c0_18], %21 {strides = array<i32>} : memref<1x256xf32, #tpu.memory_space<vmem>>, vector<1x256xf32>,
    return
  }
  func.func @transform_0(%arg0: i32) -> (i32, i32) {
    %c0_i32 = arith.constant 0 : i32
    %c0_i32_0 = arith.constant 0 : i32
    return %arg0, %c0_i32 : i32, i32
  }
  func.func @transform_1(%arg0: i32) -> (i32, i32) {
    %c0_i32 = arith.constant 0 : i32
    %c0_i32_0 = arith.constant 0 : i32
    %c0_i32_1 = arith.constant 0 : i32
    return %c0_i32, %c0_i32_0 : i32, i32
  }
  func.func @transform_2(%arg0: i32) -> (i32, i32) {
    %c0_i32 = arith.constant 0 : i32
    %c0_i32_0 = arith.constant 0 : i32
    %c0_i32_1 = arith.constant 0 : i32
    return %c0_i32, %c0_i32_0 : i32, i32
  }
  func.func @transform_3(%arg0: i32) -> (i32, i32) {
    %c0_i32 = arith.constant 0 : i32
    %c0_i32_0 = arith.constant 0 : i32
    %c0_i32_1 = arith.constant 0 : i32
    return %c0_i32, %c0_i32_0 : i32, i32
  }
  func.func @transform_4(%arg0: i32) -> (i32, i32) {
    %c0_i32 = arith.constant 0 : i32
    %c0_i32_0 = arith.constant 0 : i32
    %c0_i32_1 = arith.constant 0 : i32
    return %c0_i32, %c0_i32_0 : i32, i32
  }
  func.func @transform_5(%arg0: i32) -> (i32, i32) {
    %c0_i32 = arith.constant 0 : i32
    %c0_i32_0 = arith.constant 0 : i32
    %c0_i32_1 = arith.constant 0 : i32
    return %c0_i32, %c0_i32_0 : i32, i32
  }
  func.func @transform_6(%arg0: i32) -> (i32, i32) {
    %c0_i32 = arith.constant 0 : i32
    %c0_i32_0 = arith.constant 0 : i32
    %c0_i32_1 = arith.constant 0 : i32
    return %c0_i32, %c0_i32_0 : i32, i32
  }
  func.func @transform_7(%arg0: i32) -> (i32, i32) {
    %c0_i32 = arith.constant 0 : i32
    %c0_i32_0 = arith.constant 0 : i32
    return %c0_i32, %arg0 : i32, i32
  }
}

</mosaic_0001>

<llo_original>
// kernel: tpu_custom_call.1
$region0: #{tpu_custom_call.1}
  #allocation0 [shape = 'u32[]', space=smem, size = 0x4, offset = 0x4, fixed_abs, tag = 'smem constant byte address 0x4 - core index']
  #allocation1 [shape = 'u32[144,128]{1,0:T(1,128)}', space=vmem, size = 0x12000, scoped, tag = 'internal scratch']
  #allocation2 [shape = 'f32[1,1]{1,0:T(1,128)S(1)}', space=vmem, size = 0x200, scoped, tag = 'scoped memory for tpu_custom_call.1']
  %s0 = inlined_call_operand.vmem [shape: bf16[384,24], index: 0, kind: input, shape index: {}]
  %s1 = inlined_call_operand.vmem [shape: bf16[24,32], index: 1, kind: input, shape index: {}]
  %s2 = inlined_call_operand.vmem [shape: f32[1,32], index: 2, kind: input, shape index: {}]
  %s3 = inlined_call_operand.vmem [shape: bf16[32,32], index: 3, kind: input, shape index: {}]
  %s4 = inlined_call_operand.vmem [shape: f32[1,32], index: 4, kind: input, shape index: {}]
  %s5 = inlined_call_operand.vmem [shape: bf16[1,32], index: 5, kind: input, shape index: {}]
  %s6 = inlined_call_operand.<no memory space> [shape: f32[1,1], index: 6, kind: input, shape index: {}]
  %s7 = inlined_call_operand.hbm [shape: f32[1,512], index: 7, kind: output, shape index: {}]
  %s8 = sld [smem:[#allocation0]]
  $region61: #{tpu_custom_call.1} parent=0
    _
  %s10 = ssub.s32 1, %s8
  %s11 = scalar_select 0, %s10, %s8
  %v12 = vstv %s6
  %13 = vst [vmem:[#allocation2] sm:$0x1] %v12
  $region1: #{tpu_custom_call.1} parent=0
    #allocation3 [shape = 'u8[2048]{0}', space=vmem, size = 0x800, scoped, tag = 'output window, operand 0']
    #allocation4 [shape = 's32[2]{0}', space=sflag, size = 0x8, scoped, tag = 'scoped memory for tpu_custom_call.1']
    %14 = vsyncpa [#allocation4], 0
    %s15 = scalar_lea.sflag [#allocation4], 1
    %16 = vsyncpa %s15, 0
    loop: start=0, step=1, limit=4
    $region2: #{tpu_custom_call.1} parent=1 // loop_pre_header
      _
    $region3: #{tpu_custom_call.1} parent=1 // loop_header
      %s18 = sphi 0, %s22
      %p19 = scmp.ge.s32.totalorder %s18, 4
      %s28 = sphi 0, %s30
      %s31 = sphi 0, %s28
      %s32 = sphi 0, %s31
      %s48 = sphi 0, %s32
      %s52 = sphi 0, %s52
      %s54 = sphi 0, %s52
      %s55 = sphi 0, %s54
      %s69 = sphi 0, %s55
      %s73 = sphi 0, %s73
      %s75 = sphi 0, %s73
      %s76 = sphi 0, %s75
      %s90 = sphi 0, %s76
      %s94 = sphi 0, %s94
      %s96 = sphi 0, %s94
      %s97 = sphi 0, %s96
      %s111 = sphi 0, %s97
      %s115 = sphi 0, %s115
      %s117 = sphi 0, %s115
      %s118 = sphi 0, %s117
      %s132 = sphi 0, %s118
      %s136 = sphi 0, %s136
      %s138 = sphi 0, %s136
      %s139 = sphi 0, %s138
      %s153 = sphi 0, %s139
      %s157 = sphi 0, %s157
      %s159 = sphi 0, %s157
      %s160 = sphi 0, %s159
      %s174 = sphi 0, %s160
      %s180 = sphi 0, %s182
      %s183 = sphi 0, %s180
      %s184 = sphi 0, %s183
      %s200 = sphi 0, %s184
    $region4: #{tpu_custom_call.1} parent=1 // loop_header_branch
      %21 = sbr.rel (%p19) target = $region8
    $region5: #{tpu_custom_call.1} parent=1 // loop_body
      %s23 = ssub.s32 %s18, 1
      %s24 = ssub.s32 %s18, 2
      %s25 = sadd.s32 %s18, 1
      %s26 = ssub.s32 %s18, %s25
      %p27 = scmp.eq.s32.totalorder %s26, 0
      %s29 = sadd.s32 %s28, 1
      %s30 = scalar_select %p27, %s28, %s29
      %p33 = pneg %p27
      %p34 = scmp.eq.s32.totalorder %s18, 1
      %p35 = por %p33, %p34
      %p36 = scmp.ne.s32.totalorder %s28, %s31
      %p37 = scmp.eq.s32.totalorder %s18, 0
      %p38 = por %p36, %p37
      %p39 = scmp.ne.s32.totalorder %s28, %s31
      %p40 = scmp.eq.s32.totalorder %s23, 1
      %p41 = por %p39, %p40
      %p42 = scmp.ne.s32.totalorder %s31, %s32
      %p43 = scmp.eq.s32.totalorder %s23, 0
      %p44 = por %p42, %p43
      %p45 = scmp.ne.s32.totalorder %s31, %s32
      %p46 = scmp.eq.s32.totalorder %s24, 1
      %p47 = por %p45, %p46
      %p49 = scmp.ne.s32.totalorder %s32, %s48
      %p50 = scmp.eq.s32.totalorder %s24, 0
      %p51 = por %p49, %p50
      %s53 = sadd.s32 %s52, 1
      %p56 = scmp.eq.s32.totalorder %s18, 1
      %p57 = scmp.ne.s32.totalorder %s52, %s54
      %p58 = scmp.eq.s32.totalorder %s18, 0
      %p59 = por %p57, %p58
      %p60 = scmp.ne.s32.totalorder %s52, %s54
      %p61 = scmp.eq.s32.totalorder %s23, 1
      %p62 = por %p60, %p61
      %p63 = scmp.ne.s32.totalorder %s54, %s55
      %p64 = scmp.eq.s32.totalorder %s23, 0
      %p65 = por %p63, %p64
      %p66 = scmp.ne.s32.totalorder %s54, %s55
      %p67 = scmp.eq.s32.totalorder %s24, 1
      %p68 = por %p66, %p67
      %p70 = scmp.ne.s32.totalorder %s55, %s69
      %p71 = scmp.eq.s32.totalorder %s24, 0
      %p72 = por %p70, %p71
      %s74 = sadd.s32 %s73, 1
      %p77 = scmp.eq.s32.totalorder %s18, 1
      %p78 = scmp.ne.s32.totalorder %s73, %s75
      %p79 = scmp.eq.s32.totalorder %s18, 0
      %p80 = por %p78, %p79
      %p81 = scmp.ne.s32.totalorder %s73, %s75
      %p82 = scmp.eq.s32.totalorder %s23, 1
      %p83 = por %p81, %p82
      %p84 = scmp.ne.s32.totalorder %s75, %s76
      %p85 = scmp.eq.s32.totalorder %s23, 0
      %p86 = por %p84, %p85
      %p87 = scmp.ne.s32.totalorder %s75, %s76
      %p88 = scmp.eq.s32.totalorder %s24, 1
      %p89 = por %p87, %p88
      %p91 = scmp.ne.s32.totalorder %s76, %s90
      %p92 = scmp.eq.s32.totalorder %s24, 0
      %p93 = por %p91, %p92
      %s95 = sadd.s32 %s94, 1
      %p98 = scmp.eq.s32.totalorder %s18, 1
      %p99 = scmp.ne.s32.totalorder %s94, %s96
      %p100 = scmp.eq.s32.totalorder %s18, 0
      %p101 = por %p99, %p100
      %p102 = scmp.ne.s32.totalorder %s94, %s96
      %p103 = scmp.eq.s32.totalorder %s23, 1
      %p104 = por %p102, %p103
      %p105 = scmp.ne.s32.totalorder %s96, %s97
      %p106 = scmp.eq.s32.totalorder %s23, 0
      %p107 = por %p105, %p106
      %p108 = scmp.ne.s32.totalorder %s96, %s97
      %p109 = scmp.eq.s32.totalorder %s24, 1
      %p110 = por %p108, %p109
      %p112 = scmp.ne.s32.totalorder %s97, %s111
      %p113 = scmp.eq.s32.totalorder %s24, 0
      %p114 = por %p112, %p113
      %s116 = sadd.s32 %s115, 1
      %p119 = scmp.eq.s32.totalorder %s18, 1
      %p120 = scmp.ne.s32.totalorder %s115, %s117
      %p121 = scmp.eq.s32.totalorder %s18, 0
      %p122 = por %p120, %p121
      %p123 = scmp.ne.s32.totalorder %s115, %s117
      %p124 = scmp.eq.s32.totalorder %s23, 1
      %p125 = por %p123, %p124
      %p126 = scmp.ne.s32.totalorder %s117, %s118
      %p127 = scmp.eq.s32.totalorder %s23, 0
      %p128 = por %p126, %p127
      %p129 = scmp.ne.s32.totalorder %s117, %s118
      %p130 = scmp.eq.s32.totalorder %s24, 1
      %p131 = por %p129, %p130
      %p133 = scmp.ne.s32.totalorder %s118, %s132
      %p134 = scmp.eq.s32.totalorder %s24, 0
      %p135 = por %p133, %p134
      %s137 = sadd.s32 %s136, 1
      %p140 = scmp.eq.s32.totalorder %s18, 1
      %p141 = scmp.ne.s32.totalorder %s136, %s138
      %p142 = scmp.eq.s32.totalorder %s18, 0
      %p143 = por %p141, %p142
      %p144 = scmp.ne.s32.totalorder %s136, %s138
      %p145 = scmp.eq.s32.totalorder %s23, 1
      %p146 = por %p144, %p145
      %p147 = scmp.ne.s32.totalorder %s138, %s139
      %p148 = scmp.eq.s32.totalorder %s23, 0
      %p149 = por %p147, %p148
      %p150 = scmp.ne.s32.totalorder %s138, %s139
      %p151 = scmp.eq.s32.totalorder %s24, 1
      %p152 = por %p150, %p151
      %p154 = scmp.ne.s32.totalorder %s139, %s153
      %p155 = scmp.eq.s32.totalorder %s24, 0
      %p156 = por %p154, %p155
      %s158 = sadd.s32 %s157, 1
      %p161 = scmp.eq.s32.totalorder %s18, 1
      %p162 = scmp.ne.s32.totalorder %s157, %s159
      %p163 = scmp.eq.s32.totalorder %s18, 0
      %p164 = por %p162, %p163
      %p165 = scmp.ne.s32.totalorder %s157, %s159
      %p166 = scmp.eq.s32.totalorder %s23, 1
      %p167 = por %p165, %p166
      %p168 = scmp.ne.s32.totalorder %s159, %s160
      %p169 = scmp.eq.s32.totalorder %s23, 0
      %p170 = por %p168, %p169
      %p171 = scmp.ne.s32.totalorder %s159, %s160
      %p172 = scmp.eq.s32.totalorder %s24, 1
      %p173 = por %p171, %p172
      %p175 = scmp.ne.s32.totalorder %s160, %s174
      %p176 = scmp.eq.s32.totalorder %s24, 0
      %p177 = por %p175, %p176
      %s178 = ssub.s32 %s18, %s25
      %p179 = scmp.eq.s32.totalorder %s178, 0
      %s181 = sadd.s32 %s180, 1
      %s182 = scalar_select %p179, %s180, %s181
      %p185 = pneg %p179
      %p186 = scmp.eq.s32.totalorder %s18, 1
      %p187 = por %p185, %p186
      %p188 = scmp.ne.s32.totalorder %s180, %s183
      %p189 = scmp.eq.s32.totalorder %s18, 0
      %p190 = por %p188, %p189
      %p191 = scmp.ne.s32.totalorder %s180, %s183
      %p192 = scmp.eq.s32.totalorder %s23, 1
      %p193 = por %p191, %p192
      %p194 = scmp.ne.s32.totalorder %s183, %s184
      %p195 = scmp.eq.s32.totalorder %s23, 0
      %p196 = por %p194, %p195
      %p197 = scmp.ne.s32.totalorder %s183, %s184
      %p198 = scmp.eq.s32.totalorder %s24, 1
      %p199 = por %p197, %p198
      %p201 = scmp.ne.s32.totalorder %s184, %s200
      %p202 = scmp.eq.s32.totalorder %s24, 0
      %p203 = por %p201, %p202
      %p204 = scmp.le.s32.totalorder 1, %s18
      %p205 = scmp.lt.s32.totalorder %s18, 3
      %p206 = pnand %p204, %p205
      %p207 = pneg %p206
      // Predicated region
      $region9: #{tpu_custom_call.1} parent=5 // pred_check
        _
      $region10: #{tpu_custom_call.1} parent=5 // pred_check_branch
        %209 = sbr.rel (%p206) target = $region12
      $region11: #{tpu_custom_call.1} parent=5 // pred_region
        %s210 = ssub.s32 %s18, 1
        // Predicated region
        $region13: #{tpu_custom_call.1} parent=11 // pred_check
          %p211 = pneg %p65
        $region14: #{tpu_custom_call.1} parent=11 // pred_check_branch
          %213 = sbr.rel (%p211) target = $region16
        $region15: #{tpu_custom_call.1} parent=11 // pred_region
          _
        $region16: #{tpu_custom_call.1} parent=11 // pred_fallthru
          _
        // Predicated region
        $region17: #{tpu_custom_call.1} parent=11 // pred_check
          %p214 = pneg %p86
        $region18: #{tpu_custom_call.1} parent=11 // pred_check_branch
          %216 = sbr.rel (%p214) target = $region20
        $region19: #{tpu_custom_call.1} parent=11 // pred_region
          _
        $region20: #{tpu_custom_call.1} parent=11 // pred_fallthru
          _
        // Predicated region
        $region21: #{tpu_custom_call.1} parent=11 // pred_check
          %p217 = pneg %p107
        $region22: #{tpu_custom_call.1} parent=11 // pred_check_branch
          %219 = sbr.rel (%p217) target = $region24
        $region23: #{tpu_custom_call.1} parent=11 // pred_region
          _
        $region24: #{tpu_custom_call.1} parent=11 // pred_fallthru
          _
        // Predicated region
        $region25: #{tpu_custom_call.1} parent=11 // pred_check
          %p220 = pneg %p128
        $region26: #{tpu_custom_call.1} parent=11 // pred_check_branch
          %222 = sbr.rel (%p220) target = $region28
        $region27: #{tpu_custom_call.1} parent=11 // pred_region
          _
        $region28: #{tpu_custom_call.1} parent=11 // pred_fallthru
          _
        // Predicated region
        $region29: #{tpu_custom_call.1} parent=11 // pred_check
          %p223 = pneg %p149
        $region30: #{tpu_custom_call.1} parent=11 // pred_check_branch
          %225 = sbr.rel (%p223) target = $region32
        $region31: #{tpu_custom_call.1} parent=11 // pred_region
          _
        $region32: #{tpu_custom_call.1} parent=11 // pred_fallthru
          _
        // Predicated region
        $region33: #{tpu_custom_call.1} parent=11 // pred_check
          %p226 = pneg %p170
        $region34: #{tpu_custom_call.1} parent=11 // pred_check_branch
          %228 = sbr.rel (%p226) target = $region36
        $region35: #{tpu_custom_call.1} parent=11 // pred_region
          _
        $region36: #{tpu_custom_call.1} parent=11 // pred_fallthru
          _
      $region12: #{tpu_custom_call.1} parent=5 // pred_fallthru
        _
      %p229 = scmp.lt.s32.totalorder %s18, 2
      // Predicated region
      $region37: #{tpu_custom_call.1} parent=5 // pred_check
        %p230 = pneg %p229
      $region38: #{tpu_custom_call.1} parent=5 // pred_check_branch
        %232 = sbr.rel (%p230) target = $region40
      $region39: #{tpu_custom_call.1} parent=5 // pred_region
        // Predicated region
        $region41: #{tpu_custom_call.1} parent=39 // pred_check
          %p233 = pneg %p38
        $region42: #{tpu_custom_call.1} parent=39 // pred_check_branch
          %235 = sbr.rel (%p233) target = $region44
        $region43: #{tpu_custom_call.1} parent=39 // pred_region
          %s236 = smul.u32 32, %s18
          %s237 = ssub.s32 48, %s236
          %p238 = scmp.lt.s32.totalorder %s237, 32
          %s239 = scalar_select %p238, %s237, 32
          %s240 = smul.u32 64, %s239
          %p241 = scmp.lt.s32.totalorder %s236, 47
          %s242 = scalar_select %p241, %s236, 47
          %s243 = smul.addr %s242, 4
          %s244 = scalar_lea.vmem %s0, %s243
          %s245 = smul.u32 32, %s18
          %s246 = ssub.s32 48, %s245
          %p247 = scmp.lt.s32.totalorder %s246, 32
          %s248 = scalar_select %p247, %s246, 32
          %s249 = smul.u32 64, %s248
        $region44: #{tpu_custom_call.1} parent=39 // pred_fallthru
          _
      $region40: #{tpu_custom_call.1} parent=5 // pred_fallthru
        _
      %p250 = scmp.le.s32.totalorder 1, %s18
      %p251 = scmp.lt.s32.totalorder %s18, 3
      %p252 = pnand %p250, %p251
      %p253 = pneg %p252
      // Predicated region
      $region45: #{tpu_custom_call.1} parent=5 // pred_check
        _
      $region46: #{tpu_custom_call.1} parent=5 // pred_check_branch
        %255 = sbr.rel (%p252) target = $region48
      $region47: #{tpu_custom_call.1} parent=5 // pred_region
        %s256 = ssub.s32 %s18, 1
        %s257 = smul.u32 32, %s23
        %s258 = ssub.s32 48, %s257
        %p259 = scmp.lt.s32.totalorder %s258, 32
        %s260 = scalar_select %p259, %s258, 32
        %s261 = smul.u32 64, %s260
        %p262 = scmp.lt.s32.totalorder %s257, 47
        %s263 = scalar_select %p262, %s257, 47
        %s264 = smul.addr %s263, 4
        %s265 = scalar_lea.vmem %s0, %s264
        %p266 = pneg %p44
        %p267 = pneg %p41
        %p268 = pneg %p65
        %p269 = pneg %p62
        %p270 = pneg %p86
        %p271 = pneg %p83
        %p272 = pneg %p107
        %p273 = pneg %p104
        %p274 = pneg %p128
        %p275 = pneg %p125
        %p276 = pneg %p149
        %p277 = pneg %p146
        %p278 = pneg %p170
        %p279 = pneg %p167
        %p280 = pneg %p196
        %p281 = pneg %p193
        %s282 = sand.u32 %s183, 1
        %s283 = scalar_lea.sflag [#allocation4], %s282
        %s284 = sand.u32 %s183, 1
        %s285 = smul.addr %s284, 2
        %s286 = scalar_lea.vmem [#allocation3], %s285
        %s287 = smul.u32 32, %s23
        %s288 = ssub.s32 48, %s287
        %p289 = scmp.lt.s32.totalorder %s288, 32
        %s290 = scalar_select %p289, %s288, 32
        %s291 = smul.u32 64, %s290
        %p292 = scmp.lt.s32.totalorder %s287, 47
        %s293 = scalar_select %p292, %s287, 47
        %s294 = smul.addr %s293, 4
        %s295 = scalar_lea.vmem %s0, %s294
        %s296 = smul.u32 32, %s23
        %s297 = ssub.s32 48, %s296
        %p298 = scmp.lt.s32.totalorder %s297, 32
        %s299 = scalar_select %p298, %s297, 32
        %s300 = smul.u32 64, %s299
        %s301 = smul.u32 2, %s23
        %v303 = vld [vmem:[%s295] sm:$0xf]
        %v304 = vld [vmem:[%s295 + $0x4] sm:$0xf]
        %v305 = vld [vmem:[%s295 + $0x8] sm:$0xf]
        %v306 = vld [vmem:[%s295 + $0xc] sm:$0xf]
        %v307 = vld [vmem:[%s295 + $0x10] sm:$0xf]
        %v308 = vld [vmem:[%s295 + $0x14] sm:$0xf]
        %v309 = vld [vmem:[%s295 + $0x18] sm:$0xf]
        %v310 = vld [vmem:[%s295 + $0x1c] sm:$0xf]
        %v311 = vld [vmem:[%s295 + $0x20] sm:$0xf]
        %v312 = vld [vmem:[%s295 + $0x24] sm:$0xf]
        %v313 = vld [vmem:[%s295 + $0x28] sm:$0xf]
        %v314 = vld [vmem:[%s295 + $0x2c] sm:$0xf]
        %v315 = vld [vmem:[%s295 + $0x30] sm:$0xf]
        %v316 = vld [vmem:[%s295 + $0x34] sm:$0xf]
        %v317 = vld [vmem:[%s295 + $0x38] sm:$0xf]
        %v318 = vld [vmem:[%s295 + $0x3c] sm:$0xf]
        %v319 = vld [vmem:[%s295 + $0x40] sm:$0xf]
        %v320 = vld [vmem:[%s295 + $0x44] sm:$0xf]
        %v321 = vld [vmem:[%s295 + $0x48] sm:$0xf]
        %v322 = vld [vmem:[%s295 + $0x4c] sm:$0xf]
        %v323 = vld [vmem:[%s295 + $0x50] sm:$0xf]
        %v324 = vld [vmem:[%s295 + $0x54] sm:$0xf]
        %v325 = vld [vmem:[%s295 + $0x58] sm:$0xf]
        %v326 = vld [vmem:[%s295 + $0x5c] sm:$0xf]
        %v327 = vld [vmem:[%s295 + $0x60] sm:$0xf]
        %v328 = vld [vmem:[%s295 + $0x64] sm:$0xf]
        %v329 = vld [vmem:[%s295 + $0x68] sm:$0xf]
        %v330 = vld [vmem:[%s295 + $0x6c] sm:$0xf]
        %v331 = vld [vmem:[%s295 + $0x70] sm:$0xf]
        %v332 = vld [vmem:[%s295 + $0x74] sm:$0xf]
        %v333 = vld [vmem:[%s295 + $0x78] sm:$0xf]
        %v334 = vld [vmem:[%s295 + $0x7c] sm:$0xf]
        %v335 = vld [vmem:[%s1] sm:$0xf]
        %v336 = vld [vmem:[%s1 + $0x4] sm:$0xf]
        %v337 = vld [vmem:[%s1 + $0x8] sm:$0xf]
        %v338 = vld [vmem:[%s2] sm:$0x1]
        %v340 = vlaneseq
        %v341 = vshrl.u32 %v340, 7
        %v342 = vsub.s32 0, %v341
        %v343 = vrot.slane %v338, %v342
        %v377 = vunpack.c.l.b16 %v303
        %v378 = vunpack.c.l.b16 %v304
        %v379 = vunpack.c.l.b16 %v305
        %v380 = vunpack.c.l.b16 %v306
        %v381 = vunpack.c.l.b16 %v307
        %v382 = vunpack.c.l.b16 %v308
        %v383 = vunpack.c.l.b16 %v309
        %v384 = vunpack.c.l.b16 %v310
        %v385 = vunpack.c.l.b16 %v311
        %v386 = vunpack.c.l.b16 %v312
        %v387 = vunpack.c.l.b16 %v313
        %v388 = vunpack.c.l.b16 %v314
        %v389 = vunpack.c.l.b16 %v315
        %v390 = vunpack.c.l.b16 %v316
        %v391 = vunpack.c.l.b16 %v317
        %v392 = vunpack.c.l.b16 %v318
        %v393 = vunpack.c.l.b16 %v319
        %v394 = vunpack.c.l.b16 %v320
        %v395 = vunpack.c.l.b16 %v321
        %v396 = vunpack.c.l.b16 %v322
        %v397 = vunpack.c.l.b16 %v323
        %v398 = vunpack.c.l.b16 %v324
        %v399 = vunpack.c.l.b16 %v325
        %v400 = vunpack.c.l.b16 %v326
        %v401 = vunpack.c.l.b16 %v327
        %v402 = vunpack.c.l.b16 %v328
        %v403 = vunpack.c.l.b16 %v329
        %v404 = vunpack.c.l.b16 %v330
        %v405 = vunpack.c.l.b16 %v331
        %v406 = vunpack.c.l.b16 %v332
        %v407 = vunpack.c.l.b16 %v333
        %v408 = vunpack.c.l.b16 %v334
        %v409 = vpack.c.b16 %v378, %v377
        %v410 = vpack.c.b16 %v380, %v379
        %v411 = vpack.c.b16 %v382, %v381
        %v412 = vpack.c.b16 %v384, %v383
        %v413 = vpack.c.b16 %v386, %v385
        %v414 = vpack.c.b16 %v388, %v387
        %v415 = vpack.c.b16 %v390, %v389
        %v416 = vpack.c.b16 %v392, %v391
        %v417 = vpack.c.b16 %v394, %v393
        %v418 = vpack.c.b16 %v396, %v395
        %v419 = vpack.c.b16 %v398, %v397
        %v420 = vpack.c.b16 %v400, %v399
        %v421 = vpack.c.b16 %v402, %v401
        %v422 = vpack.c.b16 %v404, %v403
        %v423 = vpack.c.b16 %v406, %v405
        %v424 = vpack.c.b16 %v408, %v407
        %v428 = vunpack.c.l.b16 %v335
        %v429 = vunpack.c.l.b16 %v336
        %v430 = vunpack.c.l.b16 %v337
        %v431 = vpack.c.b16 %v429, %v428
        %v432 = vpack.c.b16 %v430, %v430
        %vm434 = vcmask 195584
        %v436 = vsel %vm434, %v409, 0
        %v439 = vsel %vm434, %v410, 0
        %v442 = vsel %vm434, %v411, 0
        %v445 = vsel %vm434, %v412, 0
        %v448 = vsel %vm434, %v413, 0
        %v451 = vsel %vm434, %v414, 0
        %v454 = vsel %vm434, %v415, 0
        %v457 = vsel %vm434, %v416, 0
        %v460 = vsel %vm434, %v417, 0
        %v463 = vsel %vm434, %v418, 0
        %v466 = vsel %vm434, %v419, 0
        %v469 = vsel %vm434, %v420, 0
        %v472 = vsel %vm434, %v421, 0
        %v475 = vsel %vm434, %v422, 0
        %v478 = vsel %vm434, %v423, 0
        %v481 = vsel %vm434, %v424, 0
        %vm483 = vcmask 1043456
        %v485 = vsel %vm483, %v432, 0
        %487 = vmatprep.subr.bf16.mxu0 0
        %488 = vmatpush1.bf16.msra.mxu0 %v431
        %489 = vmatprep.subr.bf16.mxu0 0
        %490 = vmatpush1.bf16.msra.mxu0 %v485
        %491 = vmatprep.subr.bf16.mxu0 0
        %492 = vmatpush1.bf16.msra.mxu0 0
        %493 = vmatprep.subr.bf16.mxu0 0
        %494 = vmatpush1.bf16.msra.mxu0 0
        %495 = vmatprep.subr.bf16.mxu0 0
        %496 = vmatpush1.bf16.msra.mxu0 0
        %497 = vmatprep.subr.bf16.mxu0 0
        %498 = vmatpush1.bf16.msra.mxu0 0
        %499 = vmatprep.subr.bf16.mxu0 0
        %500 = vmatpush1.bf16.msra.mxu0 0
        %501 = vmatprep.subr.bf16.mxu0 0
        %502 = vmatpush1.bf16.msra.mxu0 0
        %503 = vmatprep.subr.bf16.mxu0 0
        %504 = vmatpush1.bf16.msra.mxu0 0
        %505 = vmatprep.subr.bf16.mxu0 0
        %506 = vmatpush1.bf16.msra.mxu0 0
        %507 = vmatprep.subr.bf16.mxu0 0
        %508 = vmatpush1.bf16.msra.mxu0 0
        %509 = vmatprep.subr.bf16.mxu0 0
        %510 = vmatpush1.bf16.msra.mxu0 0
        %511 = vmatprep.subr.bf16.mxu0 0
        %512 = vmatpush1.bf16.msra.mxu0 0
        %513 = vmatprep.subr.bf16.mxu0 0
        %514 = vmatpush1.bf16.msra.mxu0 0
        %515 = vmatprep.subr.bf16.mxu0 0
        %516 = vmatpush1.bf16.msra.mxu0 0
        %517 = vmatprep.subr.bf16.mxu0 0
        %518 = vmatpush1.bf16.msra.mxu0 0
        %519 = vmatprep.mubr.bf16.mxu0 0
        %520 = vmatmul.mubr.bf16.gmra.mrb[0].mxu0 %v436
        %v521 = vpop.f32.mrb[0].mxu0
        %v522 = vadd.f32 %v343, %v521
        %v523 = vpop.f32.mrb[0].mxu0
        %v524 = vpop.f32.mrb[0].mxu0
        %v525 = vadd.f32 %v343, %v524
        %v526 = vpop.f32.mrb[0].mxu0
        %527 = vmatprep.mubr.bf16.mxu0 0
        %528 = vmatmul.mubr.bf16.gmra.mrb[0].mxu0 %v439
        %v529 = vpop.f32.mrb[0].mxu0
        %v530 = vadd.f32 %v343, %v529
        %v531 = vpop.f32.mrb[0].mxu0
        %v532 = vpop.f32.mrb[0].mxu0
        %v533 = vadd.f32 %v343, %v532
        %v534 = vpop.f32.mrb[0].mxu0
        %535 = vmatprep.mubr.bf16.mxu0 0
        %536 = vmatmul.mubr.bf16.gmra.mrb[0].mxu0 %v442
        %v537 = vpop.f32.mrb[0].mxu0
        %v538 = vadd.f32 %v343, %v537
        %v539 = vpop.f32.mrb[0].mxu0
        %v540 = vpop.f32.mrb[0].mxu0
        %v541 = vadd.f32 %v343, %v540
        %v542 = vpop.f32.mrb[0].mxu0
        %543 = vmatprep.mubr.bf16.mxu0 0
        %544 = vmatmul.mubr.bf16.gmra.mrb[0].mxu0 %v445
        %v545 = vpop.f32.mrb[0].mxu0
        %v546 = vadd.f32 %v343, %v545
        %v547 = vpop.f32.mrb[0].mxu0
        %v548 = vpop.f32.mrb[0].mxu0
        %v549 = vadd.f32 %v343, %v548
        %v550 = vpop.f32.mrb[0].mxu0
        %551 = vmatprep.mubr.bf16.mxu0 0
        %552 = vmatmul.mubr.bf16.gmra.mrb[0].mxu0 %v448
        %v553 = vpop.f32.mrb[0].mxu0
        %v554 = vadd.f32 %v343, %v553
        %v555 = vpop.f32.mrb[0].mxu0
        %v556 = vpop.f32.mrb[0].mxu0
        %v557 = vadd.f32 %v343, %v556
        %v558 = vpop.f32.mrb[0].mxu0
        %559 = vmatprep.mubr.bf16.mxu0 0
        %560 = vmatmul.mubr.bf16.gmra.mrb[0].mxu0 %v451
        %v561 = vpop.f32.mrb[0].mxu0
        %v562 = vadd.f32 %v343, %v561
        %v563 = vpop.f32.mrb[0].mxu0
        %v564 = vpop.f32.mrb[0].mxu0
        %v565 = vadd.f32 %v343, %v564
        %v566 = vpop.f32.mrb[0].mxu0
        %567 = vmatprep.mubr.bf16.mxu0 0
        %568 = vmatmul.mubr.bf16.gmra.mrb[0].mxu0 %v454
        %v569 = vpop.f32.mrb[0].mxu0
        %v570 = vadd.f32 %v343, %v569
        %v571 = vpop.f32.mrb[0].mxu0
        %v572 = vpop.f32.mrb[0].mxu0
        %v573 = vadd.f32 %v343, %v572
        %v574 = vpop.f32.mrb[0].mxu0
        %575 = vmatprep.mubr.bf16.mxu0 0
        %576 = vmatmul.mubr.bf16.gmra.mrb[0].mxu0 %v457
        %v577 = vpop.f32.mrb[0].mxu0
        %v578 = vadd.f32 %v343, %v577
        %v579 = vpop.f32.mrb[0].mxu0
        %v580 = vpop.f32.mrb[0].mxu0
        %v581 = vadd.f32 %v343, %v580
        %v582 = vpop.f32.mrb[0].mxu0
        %583 = vmatprep.mubr.bf16.mxu0 0
        %584 = vmatmul.mubr.bf16.gmra.mrb[0].mxu0 %v460
        %v585 = vpop.f32.mrb[0].mxu0
        %v586 = vadd.f32 %v343, %v585
        %v587 = vpop.f32.mrb[0].mxu0
        %v588 = vpop.f32.mrb[0].mxu0
        %v589 = vadd.f32 %v343, %v588
        %v590 = vpop.f32.mrb[0].mxu0
        %591 = vmatprep.mubr.bf16.mxu0 0
        %592 = vmatmul.mubr.bf16.gmra.mrb[0].mxu0 %v463
        %v593 = vpop.f32.mrb[0].mxu0
        %v594 = vadd.f32 %v343, %v593
        %v595 = vpop.f32.mrb[0].mxu0
        %v596 = vpop.f32.mrb[0].mxu0
        %v597 = vadd.f32 %v343, %v596
        %v598 = vpop.f32.mrb[0].mxu0
        %599 = vmatprep.mubr.bf16.mxu0 0
        %600 = vmatmul.mubr.bf16.gmra.mrb[0].mxu0 %v466
        %v601 = vpop.f32.mrb[0].mxu0
        %v602 = vadd.f32 %v343, %v601
        %v603 = vpop.f32.mrb[0].mxu0
        %v604 = vpop.f32.mrb[0].mxu0
        %v605 = vadd.f32 %v343, %v604
        %v606 = vpop.f32.mrb[0].mxu0
        %607 = vmatprep.mubr.bf16.mxu0 0
        %608 = vmatmul.mubr.bf16.gmra.mrb[0].mxu0 %v469
        %v609 = vpop.f32.mrb[0].mxu0
        %v610 = vadd.f32 %v343, %v609
        %v611 = vpop.f32.mrb[0].mxu0
        %v612 = vpop.f32.mrb[0].mxu0
        %v613 = vadd.f32 %v343, %v612
        %v614 = vpop.f32.mrb[0].mxu0
        %615 = vmatprep.mubr.bf16.mxu0 0
        %616 = vmatmul.mubr.bf16.gmra.mrb[0].mxu0 %v472
        %v617 = vpop.f32.mrb[0].mxu0
        %v618 = vadd.f32 %v343, %v617
        %v619 = vpop.f32.mrb[0].mxu0
        %v620 = vpop.f32.mrb[0].mxu0
        %v621 = vadd.f32 %v343, %v620
        %v622 = vpop.f32.mrb[0].mxu0
        %623 = vmatprep.mubr.bf16.mxu0 0
        %624 = vmatmul.mubr.bf16.gmra.mrb[0].mxu0 %v475
        %v625 = vpop.f32.mrb[0].mxu0
        %v626 = vadd.f32 %v343, %v625
        %v627 = vpop.f32.mrb[0].mxu0
        %v628 = vpop.f32.mrb[0].mxu0
        %v629 = vadd.f32 %v343, %v628
        %v630 = vpop.f32.mrb[0].mxu0
        %631 = vmatprep.mubr.bf16.mxu0 0
        %632 = vmatmul.mubr.bf16.gmra.mrb[0].mxu0 %v478
        %v633 = vpop.f32.mrb[0].mxu0
        %v634 = vadd.f32 %v343, %v633
        %v635 = vpop.f32.mrb[0].mxu0
        %v636 = vpop.f32.mrb[0].mxu0
        %v637 = vadd.f32 %v343, %v636
        %v638 = vpop.f32.mrb[0].mxu0
        %639 = vmatprep.mubr.bf16.mxu0 0
        %640 = vmatmul.mubr.bf16.gmra.mrb[0].mxu0 %v481
        %v641 = vpop.f32.mrb[0].mxu0
        %v642 = vadd.f32 %v343, %v641
        %v643 = vpop.f32.mrb[0].mxu0
        %v644 = vpop.f32.mrb[0].mxu0
        %v645 = vadd.f32 %v343, %v644
        %v646 = vpop.f32.mrb[0].mxu0
        %647 = vdwg.mxu0
        %v648 = vmax.f32 %v522, 0.0
        %v649 = vmax.f32 %v525, 0.0
        %v650 = vmax.f32 %v530, 0.0
        %v651 = vmax.f32 %v533, 0.0
        %v652 = vmax.f32 %v538, 0.0
        %v653 = vmax.f32 %v541, 0.0
        %v654 = vmax.f32 %v546, 0.0
        %v655 = vmax.f32 %v549, 0.0
        %v656 = vmax.f32 %v554, 0.0
        %v657 = vmax.f32 %v557, 0.0
        %v658 = vmax.f32 %v562, 0.0
        %v659 = vmax.f32 %v565, 0.0
        %v660 = vmax.f32 %v570, 0.0
        %v661 = vmax.f32 %v573, 0.0
        %v662 = vmax.f32 %v578, 0.0
        %v663 = vmax.f32 %v581, 0.0
        %v664 = vmax.f32 %v586, 0.0
        %v665 = vmax.f32 %v589, 0.0
        %v666 = vmax.f32 %v594, 0.0
        %v667 = vmax.f32 %v597, 0.0
        %v668 = vmax.f32 %v602, 0.0
        %v669 = vmax.f32 %v605, 0.0
        %v670 = vmax.f32 %v610, 0.0
        %v671 = vmax.f32 %v613, 0.0
        %v672 = vmax.f32 %v618, 0.0
        %v673 = vmax.f32 %v621, 0.0
        %v674 = vmax.f32 %v626, 0.0
        %v675 = vmax.f32 %v629, 0.0
        %v676 = vmax.f32 %v634, 0.0
        %v677 = vmax.f32 %v637, 0.0
        %v678 = vmax.f32 %v642, 0.0
        %v679 = vmax.f32 %v645, 0.0
        %v680 = vld [vmem:[%s3] sm:$0xf]
        %v681 = vld [vmem:[%s3 + $0x4] sm:$0xf]
        %v682 = vld [vmem:[%s3 + $0x8] sm:$0xf]
        %v683 = vld [vmem:[%s3 + $0xc] sm:$0xf]
        %v684 = vld [vmem:[%s4] sm:$0x1]
        %v685 = vpack.c.bf16 %v649, %v648
        %v686 = vpack.c.bf16 %v651, %v650
        %v687 = vpack.c.bf16 %v653, %v652
        %v688 = vpack.c.bf16 %v655, %v654
        %v689 = vpack.c.bf16 %v657, %v656
        %v690 = vpack.c.bf16 %v659, %v658
        %v691 = vpack.c.bf16 %v661, %v660
        %v692 = vpack.c.bf16 %v663, %v662
        %v693 = vpack.c.bf16 %v665, %v664
        %v694 = vpack.c.bf16 %v667, %v666
        %v695 = vpack.c.bf16 %v669, %v668
        %v696 = vpack.c.bf16 %v671, %v670
        %v697 = vpack.c.bf16 %v673, %v672
        %v698 = vpack.c.bf16 %v675, %v674
        %v699 = vpack.c.bf16 %v677, %v676
        %v700 = vpack.c.bf16 %v679, %v678
        %v702 = vlaneseq
        %v703 = vshrl.u32 %v702, 7
        %v704 = vsub.s32 0, %v703
        %v705 = vrot.slane %v684, %v704
        %v711 = vunpack.c.l.b16 %v680
        %v712 = vunpack.c.l.b16 %v681
        %v713 = vunpack.c.l.b16 %v682
        %v714 = vunpack.c.l.b16 %v683
        %v715 = vpack.c.b16 %v712, %v711
        %v716 = vpack.c.b16 %v714, %v713
        %vm719 = vcmask 261120
        %v721 = vsel %vm719, %v685, 0
        %v724 = vsel %vm719, %v686, 0
        %v727 = vsel %vm719, %v687, 0
        %v730 = vsel %vm719, %v688, 0
        %v733 = vsel %vm719, %v689, 0
        %v736 = vsel %vm719, %v690, 0
        %v739 = vsel %vm719, %v691, 0
        %v742 = vsel %vm719, %v692, 0
        %v745 = vsel %vm719, %v693, 0
        %v748 = vsel %vm719, %v694, 0
        %v751 = vsel %vm719, %v695, 0
        %v754 = vsel %vm719, %v696, 0
        %v757 = vsel %vm719, %v697, 0
        %v760 = vsel %vm719, %v698, 0
        %v763 = vsel %vm719, %v699, 0
        %v766 = vsel %vm719, %v700, 0
        %768 = vmatprep.subr.bf16.mxu0 0
        %769 = vmatpush1.bf16.msra.mxu0 %v715
        %770 = vmatprep.subr.bf16.mxu0 0
        %771 = vmatpush1.bf16.msra.mxu0 %v716
        %772 = vmatprep.subr.bf16.mxu0 0
        %773 = vmatpush1.bf16.msra.mxu0 0
        %774 = vmatprep.subr.bf16.mxu0 0
        %775 = vmatpush1.bf16.msra.mxu0 0
        %776 = vmatprep.subr.bf16.mxu0 0
        %777 = vmatpush1.bf16.msra.mxu0 0
        %778 = vmatprep.subr.bf16.mxu0 0
        %779 = vmatpush1.bf16.msra.mxu0 0
        %780 = vmatprep.subr.bf16.mxu0 0
        %781 = vmatpush1.bf16.msra.mxu0 0
        %782 = vmatprep.subr.bf16.mxu0 0
        %783 = vmatpush1.bf16.msra.mxu0 0
        %784 = vmatprep.subr.bf16.mxu0 0
        %785 = vmatpush1.bf16.msra.mxu0 0
        %786 = vmatprep.subr.bf16.mxu0 0
        %787 = vmatpush1.bf16.msra.mxu0 0
        %788 = vmatprep.subr.bf16.mxu0 0
        %789 = vmatpush1.bf16.msra.mxu0 0
        %790 = vmatprep.subr.bf16.mxu0 0
        %791 = vmatpush1.bf16.msra.mxu0 0
        %792 = vmatprep.subr.bf16.mxu0 0
        %793 = vmatpush1.bf16.msra.mxu0 0
        %794 = vmatprep.subr.bf16.mxu0 0
        %795 = vmatpush1.bf16.msra.mxu0 0
        %796 = vmatprep.subr.bf16.mxu0 0
        %797 = vmatpush1.bf16.msra.mxu0 0
        %798 = vmatprep.subr.bf16.mxu0 0
        %799 = vmatpush1.bf16.msra.mxu0 0
        %800 = vmatprep.mubr.bf16.mxu0 0
        %801 = vmatmul.mubr.bf16.gmra.mrb[0].mxu0 %v721
        %v802 = vpop.f32.mrb[0].mxu0
        %v803 = vadd.f32 %v705, %v802
        %v804 = vpop.f32.mrb[0].mxu0
        %v805 = vpop.f32.mrb[0].mxu0
        %v806 = vadd.f32 %v705, %v805
        %v807 = vpop.f32.mrb[0].mxu0
        %808 = vmatprep.mubr.bf16.mxu0 0
        %809 = vmatmul.mubr.bf16.gmra.mrb[0].mxu0 %v724
        %v810 = vpop.f32.mrb[0].mxu0
        %v811 = vadd.f32 %v705, %v810
        %v812 = vpop.f32.mrb[0].mxu0
        %v813 = vpop.f32.mrb[0].mxu0
        %v814 = vadd.f32 %v705, %v813
        %v815 = vpop.f32.mrb[0].mxu0
        %816 = vmatprep.mubr.bf16.mxu0 0
        %817 = vmatmul.mubr.bf16.gmra.mrb[0].mxu0 %v727
        %v818 = vpop.f32.mrb[0].mxu0
        %v819 = vadd.f32 %v705, %v818
        %v820 = vpop.f32.mrb[0].mxu0
        %v821 = vpop.f32.mrb[0].mxu0
        %v822 = vadd.f32 %v705, %v821
        %v823 = vpop.f32.mrb[0].mxu0
        %824 = vmatprep.mubr.bf16.mxu0 0
        %825 = vmatmul.mubr.bf16.gmra.mrb[0].mxu0 %v730
        %v826 = vpop.f32.mrb[0].mxu0
        %v827 = vadd.f32 %v705, %v826
        %v828 = vpop.f32.mrb[0].mxu0
        %v829 = vpop.f32.mrb[0].mxu0
        %v830 = vadd.f32 %v705, %v829
        %v831 = vpop.f32.mrb[0].mxu0
        %832 = vmatprep.mubr.bf16.mxu0 0
        %833 = vmatmul.mubr.bf16.gmra.mrb[0].mxu0 %v733
        %v834 = vpop.f32.mrb[0].mxu0
        %v835 = vadd.f32 %v705, %v834
        %v836 = vpop.f32.mrb[0].mxu0
        %v837 = vpop.f32.mrb[0].mxu0
        %v838 = vadd.f32 %v705, %v837
        %v839 = vpop.f32.mrb[0].mxu0
        %840 = vmatprep.mubr.bf16.mxu0 0
        %841 = vmatmul.mubr.bf16.gmra.mrb[0].mxu0 %v736
        %v842 = vpop.f32.mrb[0].mxu0
        %v843 = vadd.f32 %v705, %v842
        %v844 = vpop.f32.mrb[0].mxu0
        %v845 = vpop.f32.mrb[0].mxu0
        %v846 = vadd.f32 %v705, %v845
        %v847 = vpop.f32.mrb[0].mxu0
        %848 = vmatprep.mubr.bf16.mxu0 0
        %849 = vmatmul.mubr.bf16.gmra.mrb[0].mxu0 %v739
        %v850 = vpop.f32.mrb[0].mxu0
        %v851 = vadd.f32 %v705, %v850
        %v852 = vpop.f32.mrb[0].mxu0
        %v853 = vpop.f32.mrb[0].mxu0
        %v854 = vadd.f32 %v705, %v853
        %v855 = vpop.f32.mrb[0].mxu0
        %856 = vmatprep.mubr.bf16.mxu0 0
        %857 = vmatmul.mubr.bf16.gmra.mrb[0].mxu0 %v742
        %v858 = vpop.f32.mrb[0].mxu0
        %v859 = vadd.f32 %v705, %v858
        %v860 = vpop.f32.mrb[0].mxu0
        %v861 = vpop.f32.mrb[0].mxu0
        %v862 = vadd.f32 %v705, %v861
        %v863 = vpop.f32.mrb[0].mxu0
        %864 = vmatprep.mubr.bf16.mxu0 0
        %865 = vmatmul.mubr.bf16.gmra.mrb[0].mxu0 %v745
        %v866 = vpop.f32.mrb[0].mxu0
        %v867 = vadd.f32 %v705, %v866
        %v868 = vpop.f32.mrb[0].mxu0
        %v869 = vpop.f32.mrb[0].mxu0
        %v870 = vadd.f32 %v705, %v869
        %v871 = vpop.f32.mrb[0].mxu0
        %872 = vmatprep.mubr.bf16.mxu0 0
        %873 = vmatmul.mubr.bf16.gmra.mrb[0].mxu0 %v748
        %v874 = vpop.f32.mrb[0].mxu0
        %v875 = vadd.f32 %v705, %v874
        %v876 = vpop.f32.mrb[0].mxu0
        %v877 = vpop.f32.mrb[0].mxu0
        %v878 = vadd.f32 %v705, %v877
        %v879 = vpop.f32.mrb[0].mxu0
        %880 = vmatprep.mubr.bf16.mxu0 0
        %881 = vmatmul.mubr.bf16.gmra.mrb[0].mxu0 %v751
        %v882 = vpop.f32.mrb[0].mxu0
        %v883 = vadd.f32 %v705, %v882
        %v884 = vpop.f32.mrb[0].mxu0
        %v885 = vpop.f32.mrb[0].mxu0
        %v886 = vadd.f32 %v705, %v885
        %v887 = vpop.f32.mrb[0].mxu0
        %888 = vmatprep.mubr.bf16.mxu0 0
        %889 = vmatmul.mubr.bf16.gmra.mrb[0].mxu0 %v754
        %v890 = vpop.f32.mrb[0].mxu0
        %v891 = vadd.f32 %v705, %v890
        %v892 = vpop.f32.mrb[0].mxu0
        %v893 = vpop.f32.mrb[0].mxu0
        %v894 = vadd.f32 %v705, %v893
        %v895 = vpop.f32.mrb[0].mxu0
        %896 = vmatprep.mubr.bf16.mxu0 0
        %897 = vmatmul.mubr.bf16.gmra.mrb[0].mxu0 %v757
        %v898 = vpop.f32.mrb[0].mxu0
        %v899 = vadd.f32 %v705, %v898
        %v900 = vpop.f32.mrb[0].mxu0
        %v901 = vpop.f32.mrb[0].mxu0
        %v902 = vadd.f32 %v705, %v901
        %v903 = vpop.f32.mrb[0].mxu0
        %904 = vmatprep.mubr.bf16.mxu0 0
        %905 = vmatmul.mubr.bf16.gmra.mrb[0].mxu0 %v760
        %v906 = vpop.f32.mrb[0].mxu0
        %v907 = vadd.f32 %v705, %v906
        %v908 = vpop.f32.mrb[0].mxu0
        %v909 = vpop.f32.mrb[0].mxu0
        %v910 = vadd.f32 %v705, %v909
        %v911 = vpop.f32.mrb[0].mxu0
        %912 = vmatprep.mubr.bf16.mxu0 0
        %913 = vmatmul.mubr.bf16.gmra.mrb[0].mxu0 %v763
        %v914 = vpop.f32.mrb[0].mxu0
        %v915 = vadd.f32 %v705, %v914
        %v916 = vpop.f32.mrb[0].mxu0
        %v917 = vpop.f32.mrb[0].mxu0
        %v918 = vadd.f32 %v705, %v917
        %v919 = vpop.f32.mrb[0].mxu0
        %920 = vmatprep.mubr.bf16.mxu0 0
        %921 = vmatmul.mubr.bf16.gmra.mrb[0].mxu0 %v766
        %v922 = vpop.f32.mrb[0].mxu0
        %v923 = vadd.f32 %v705, %v922
        %v924 = vpop.f32.mrb[0].mxu0
        %v925 = vpop.f32.mrb[0].mxu0
        %v926 = vadd.f32 %v705, %v925
        %v927 = vpop.f32.mrb[0].mxu0
        %928 = vdwg.mxu0
        %v929 = vmax.f32 %v803, 0.0
        %v930 = vmax.f32 %v806, 0.0
        %v931 = vmax.f32 %v811, 0.0
        %v932 = vmax.f32 %v814, 0.0
        %v933 = vmax.f32 %v819, 0.0
        %v934 = vmax.f32 %v822, 0.0
        %v935 = vmax.f32 %v827, 0.0
        %v936 = vmax.f32 %v830, 0.0
        %v937 = vmax.f32 %v835, 0.0
        %v938 = vmax.f32 %v838, 0.0
        %v939 = vmax.f32 %v843, 0.0
        %v940 = vmax.f32 %v846, 0.0
        %v941 = vmax.f32 %v851, 0.0
        %v942 = vmax.f32 %v854, 0.0
        %v943 = vmax.f32 %v859, 0.0
        %v944 = vmax.f32 %v862, 0.0
        %v945 = vmax.f32 %v867, 0.0
        %v946 = vmax.f32 %v870, 0.0
        %v947 = vmax.f32 %v875, 0.0
        %v948 = vmax.f32 %v878, 0.0
        %v949 = vmax.f32 %v883, 0.0
        %v950 = vmax.f32 %v886, 0.0
        %v951 = vmax.f32 %v891, 0.0
        %v952 = vmax.f32 %v894, 0.0
        %v953 = vmax.f32 %v899, 0.0
        %v954 = vmax.f32 %v902, 0.0
        %v955 = vmax.f32 %v907, 0.0
        %v956 = vmax.f32 %v910, 0.0
        %v957 = vmax.f32 %v915, 0.0
        %v958 = vmax.f32 %v918, 0.0
        %v959 = vmax.f32 %v923, 0.0
        %v960 = vmax.f32 %v926, 0.0
        %v961 = vld [vmem:[%s5] sm:$0x1]
        %v962 = vld [vmem:[#allocation2] sm:$0x1]
        %v963 = vpack.c.bf16 %v930, %v929
        %v964 = vpack.c.bf16 %v932, %v931
        %v965 = vpack.c.bf16 %v934, %v933
        %v966 = vpack.c.bf16 %v936, %v935
        %v967 = vpack.c.bf16 %v938, %v937
        %v968 = vpack.c.bf16 %v940, %v939
        %v969 = vpack.c.bf16 %v942, %v941
        %v970 = vpack.c.bf16 %v944, %v943
        %v971 = vpack.c.bf16 %v946, %v945
        %v972 = vpack.c.bf16 %v948, %v947
        %v973 = vpack.c.bf16 %v950, %v949
        %v974 = vpack.c.bf16 %v952, %v951
        %v975 = vpack.c.bf16 %v954, %v953
        %v976 = vpack.c.bf16 %v956, %v955
        %v977 = vpack.c.bf16 %v958, %v957
        %v978 = vpack.c.bf16 %v960, %v959
        %980 = vset.pattern.permute.xlu0 0
        %981 = vperm.xlu0 %980, %v962
        %v982 = vpop.permute.xlu0 %981
        %v984 = vlaneseq
        %v985 = vshrl.u32 %v984, 7
        %v986 = vsub.s32 0, %v985
        %v987 = vrot.slane %v982, %v986
        %v989 = vsel %vm719, %v961, 0
        %v992 = vsel %vm719, %v963, 0
        %v995 = vsel %vm719, %v964, 0
        %v998 = vsel %vm719, %v965, 0
        %v1001 = vsel %vm719, %v966, 0
        %v1004 = vsel %vm719, %v967, 0
        %v1007 = vsel %vm719, %v968, 0
        %v1010 = vsel %vm719, %v969, 0
        %v1013 = vsel %vm719, %v970, 0
        %v1016 = vsel %vm719, %v971, 0
        %v1019 = vsel %vm719, %v972, 0
        %v1022 = vsel %vm719, %v973, 0
        %v1025 = vsel %vm719, %v974, 0
        %v1028 = vsel %vm719, %v975, 0
        %v1031 = vsel %vm719, %v976, 0
        %v1034 = vsel %vm719, %v977, 0
        %v1037 = vsel %vm719, %v978, 0
        %1039 = vmatprep.subr.bf16.mxu0 0
        %1040 = vmatpush1.bf16.xpose.msra.mxu0 %v992
        %1041 = vmatprep.subr.bf16.mxu0 0
        %1042 = vmatpush1.bf16.xpose.msra.mxu0 %v995
        %1043 = vmatprep.subr.bf16.mxu0 0
        %1044 = vmatpush1.bf16.xpose.msra.mxu0 %v998
        %1045 = vmatprep.subr.bf16.mxu0 0
        %1046 = vmatpush1.bf16.xpose.msra.mxu0 %v1001
        %1047 = vmatprep.subr.bf16.mxu0 0
        %1048 = vmatpush1.bf16.xpose.msra.mxu0 %v1004
        %1049 = vmatprep.subr.bf16.mxu0 0
        %1050 = vmatpush1.bf16.xpose.msra.mxu0 %v1007
        %1051 = vmatprep.subr.bf16.mxu0 0
        %1052 = vmatpush1.bf16.xpose.msra.mxu0 %v1010
        %1053 = vmatprep.subr.bf16.mxu0 0
        %1054 = vmatpush1.bf16.xpose.msra.mxu0 %v1013
        %1055 = vmatprep.subr.bf16.mxu0 0
        %1056 = vmatpush1.bf16.xpose.msra.mxu0 %v1016
        %1057 = vmatprep.subr.bf16.mxu0 0
        %1058 = vmatpush1.bf16.xpose.msra.mxu0 %v1019
        %1059 = vmatprep.subr.bf16.mxu0 0
        %1060 = vmatpush1.bf16.xpose.msra.mxu0 %v1022
        %1061 = vmatprep.subr.bf16.mxu0 0
        %1062 = vmatpush1.bf16.xpose.msra.mxu0 %v1025
        %1063 = vmatprep.subr.bf16.mxu0 0
        %1064 = vmatpush1.bf16.xpose.msra.mxu0 %v1028
        %1065 = vmatprep.subr.bf16.mxu0 0
        %1066 = vmatpush1.bf16.xpose.msra.mxu0 %v1031
        %1067 = vmatprep.subr.bf16.mxu0 0
        %1068 = vmatpush1.bf16.xpose.msra.mxu0 %v1034
        %1069 = vmatprep.subr.bf16.mxu0 0
        %1070 = vmatpush1.bf16.xpose.msra.mxu0 %v1037
        %1071 = vmatprep.mubr.bf16.mxu0 0
        %1072 = vmatmul.mubr.bf16.gmra.mrb[0].mxu0 %v989
        %v1073 = vpop.f32.mrb[0].mxu0
        %v1074 = vadd.f32 %v987, %v1073
        %v1075 = vpop.f32.mrb[0].mxu0
        %v1076 = vadd.f32 %v987, %v1075
        %v1077 = vpop.f32.mrb[0].mxu0
        %v1078 = vpop.f32.mrb[0].mxu0
        %1079 = vdwg.mxu0
        %v1082 = vcombine.low %v1074, %v1076
        %v1084 = vunpack.c.l.s4 1966171168
        %v1085 = vunpack.c.0.s8 %v1084
        %v1086 = vlaneseq
        %v1087 = vshrl.u32 %v1086, 7
        %v1088 = vsub.s32 %v1085, %v1087
        %v1089 = vrot.slane %v1082, %v1088
        %v1091 = vunpack.c.l.s4 1966171168
        %v1092 = vunpack.c.0.s8 %v1091
        %v1093 = vlaneseq
        %v1094 = vshrl.u32 %v1093, 7
        %v1095 = vsub.s32 %v1092, %v1094
        %v1096 = vrot.slane %v1089, %v1095
        %v1098 = vlaneseq
        %vm1099 = vcmp.ge.s32.totalorder %v1098, 0
        %vm1100 = vcmp.lt.s32.totalorder %v1098, 256
        %vm1101 = vmand %vm1099, %vm1100
        %1102 = vst.msk [vmem:[%s286] sm:$0x3] %vm1101, %v1096
        %s1103 = sand.u32 %s183, 1
        %s1104 = scalar_lea.sflag [#allocation4], %s1103
        %s1105 = sand.u32 %s183, 1
        %s1106 = smul.addr %s1105, 2
        %s1107 = scalar_lea.vmem [#allocation3], %s1106
        // Predicated region
        $region49: #{tpu_custom_call.1} parent=47 // pred_check
          %p1108 = pneg %p193
        $region50: #{tpu_custom_call.1} parent=47 // pred_check_branch
          %1110 = sbr.rel (%p1108) target = $region52
        $region51: #{tpu_custom_call.1} parent=47 // pred_region
          %s1111 = smul.u32 2, %s23
          %s1113 = ssub.s32 32, 32
          %1114 = vsyncadd %s1104, %s1113
          %s1115 = smul.addr %s1111, 16
          %s1116 = scalar_lea.hbm %s7, %s1115
          %s1118 = sshll.u32 %s1107, 4
          %s1119 = int_to_ptr.vmem [resolvable:$true] %s1118
          %1121 = dma.vmem_to_hbm [thread:$0]  %s1119, 32, %s1116, %s1104
        $region52: #{tpu_custom_call.1} parent=47 // pred_fallthru
          _
      $region48: #{tpu_custom_call.1} parent=5 // pred_fallthru
        _
      %p1122 = scmp.le.s32.totalorder 2, %s18
      // Predicated region
      $region53: #{tpu_custom_call.1} parent=5 // pred_check
        %p1123 = pneg %p1122
      $region54: #{tpu_custom_call.1} parent=5 // pred_check_branch
        %1125 = sbr.rel (%p1123) target = $region56
      $region55: #{tpu_custom_call.1} parent=5 // pred_region
        %s1126 = ssub.s32 %s18, 2
        // Predicated region
        $region57: #{tpu_custom_call.1} parent=55 // pred_check
          %p1127 = pneg %p199
        $region58: #{tpu_custom_call.1} parent=55 // pred_check_branch
          %1129 = sbr.rel (%p1127) target = $region60
        $region59: #{tpu_custom_call.1} parent=55 // pred_region
          %s1130 = sand.u32 %s184, 1
          %s1131 = scalar_lea.sflag [#allocation4], %s1130
          %s1132 = sand.u32 %s184, 1
          %s1133 = smul.addr %s1132, 2
          %s1134 = scalar_lea.vmem [#allocation3], %s1133
          %1135 = dma.done %s1131, 32
        $region60: #{tpu_custom_call.1} parent=55 // pred_fallthru
          _
      $region56: #{tpu_custom_call.1} parent=5 // pred_fallthru
        _
    $region6: #{tpu_custom_call.1} parent=1 // loop_footer
      %s22 = sadd.s32 1, %s18
    $region7: #{tpu_custom_call.1} parent=1 // loop_footer_branch
      %17 = sbr.rel target = $region3
    $region8: #{tpu_custom_call.1} parent=1 // loop_exit
      _
    %1136 = vsyncpa [#allocation4], 1
    %s1137 = scalar_lea.sflag [#allocation4], 1
    %1138 = vsyncpa %s1137, 1

// kernel: tpu_custom_call.1
$region0: #{tpu_custom_call.1}
  #allocation0 [shape = 'u32[]', space=smem, size = 0x4, offset = 0x4, fixed_abs, tag = 'smem constant byte address 0x4 - core index']
  #allocation1 [shape = 'u32[144,128]{1,0:T(1,128)}', space=vmem, size = 0x12000, scoped, tag = 'internal scratch']
  #allocation2 [shape = 'f32[1,1]{1,0:T(1,128)S(1)}', space=vmem, size = 0x200, scoped, tag = 'scoped memory for tpu_custom_call.1']
  %s0 = inlined_call_operand.vmem [shape: bf16[384,24], index: 0, kind: input, shape index: {}]
  %s1 = inlined_call_operand.vmem [shape: bf16[24,32], index: 1, kind: input, shape index: {}]
  %s2 = inlined_call_operand.vmem [shape: f32[1,32], index: 2, kind: input, shape index: {}]
  %s3 = inlined_call_operand.vmem [shape: bf16[32,32], index: 3, kind: input, shape index: {}]
  %s4 = inlined_call_operand.vmem [shape: f32[1,32], index: 4, kind: input, shape index: {}]
  %s5 = inlined_call_operand.vmem [shape: bf16[1,32], index: 5, kind: input, shape index: {}]
  %s6 = inlined_call_operand.<no memory space> [shape: f32[1,1], index: 6, kind: input, shape index: {}]
  %s7 = inlined_call_operand.hbm [shape: f32[1,512], index: 7, kind: output, shape index: {}]
  %s8 = sld [smem:[#allocation0]]
  $region61: #{tpu_custom_call.1} parent=0
    _
  %s10 = ssub.s32 1, %s8
  %s11 = scalar_select 0, %s10, %s8
  %v12 = vstv %s6
  %13 = vst [vmem:[#allocation2] sm:$0x1] %v12
  $region1: #{tpu_custom_call.1} parent=0
    #allocation3 [shape = 'u8[2048]{0}', space=vmem, size = 0x800, scoped, tag = 'output window, operand 0']
    #allocation4 [shape = 's32[2]{0}', space=sflag, size = 0x8, scoped, tag = 'scoped memory for tpu_custom_call.1']
    %14 = vsyncpa [#allocation4], 0
    %s15 = scalar_lea.sflag [#allocation4], 1
    %16 = vsyncpa %s15, 0
    loop: start=0, step=1, limit=4
    $region2: #{tpu_custom_call.1} parent=1 // loop_pre_header
      _
    $region3: #{tpu_custom_call.1} parent=1 // loop_header
      %s18 = sphi 0, %s22
      %p19 = scmp.ge.s32.totalorder %s18, 4
      %s28 = sphi 0, %s30
      %s31 = sphi 0, %s28
      %s32 = sphi 0, %s31
      %s48 = sphi 0, %s32
      %s52 = sphi 0, %s52
      %s54 = sphi 0, %s52
      %s55 = sphi 0, %s54
      %s69 = sphi 0, %s55
      %s73 = sphi 0, %s73
      %s75 = sphi 0, %s73
      %s76 = sphi 0, %s75
      %s90 = sphi 0, %s76
      %s94 = sphi 0, %s94
      %s96 = sphi 0, %s94
      %s97 = sphi 0, %s96
      %s111 = sphi 0, %s97
      %s115 = sphi 0, %s115
      %s117 = sphi 0, %s115
      %s118 = sphi 0, %s117
      %s132 = sphi 0, %s118
      %s136 = sphi 0, %s136
      %s138 = sphi 0, %s136
      %s139 = sphi 0, %s138
      %s153 = sphi 0, %s139
      %s157 = sphi 0, %s157
      %s159 = sphi 0, %s157
      %s160 = sphi 0, %s159
      %s174 = sphi 0, %s160
      %s180 = sphi 0, %s182
      %s183 = sphi 0, %s180
      %s184 = sphi 0, %s183
      %s200 = sphi 0, %s184
    $region4: #{tpu_custom_call.1} parent=1 // loop_header_branch
      %21 = sbr.rel (%p19) target = $region8
    $region5: #{tpu_custom_call.1} parent=1 // loop_body
      %s23 = ssub.s32 %s18, 1
      %s24 = ssub.s32 %s18, 2
      %s25 = sadd.s32 %s18, 1
      %s26 = ssub.s32 %s18, %s25
      %p27 = scmp.eq.s32.totalorder %s26, 0
      %s29 = sadd.s32 %s28, 1
      %s30 = scalar_select %p27, %s28, %s29
      %p33 = pneg %p27
      %p34 = scmp.eq.s32.totalorder %s18, 1
      %p35 = por %p33, %p34
      %p36 = scmp.ne.s32.totalorder %s28, %s31
      %p37 = scmp.eq.s32.totalorder %s18, 0
      %p38 = por %p36, %p37
      %p39 = scmp.ne.s32.totalorder %s28, %s31
      %p40 = scmp.eq.s32.totalorder %s23, 1
      %p41 = por %p39, %p40
      %p42 = scmp.ne.s32.totalorder %s31, %s32
      %p43 = scmp.eq.s32.totalorder %s23, 0
      %p44 = por %p42, %p43
      %p45 = scmp.ne.s32.totalorder %s31, %s32
      %p46 = scmp.eq.s32.totalorder %s24, 1
      %p47 = por %p45, %p46
      %p49 = scmp.ne.s32.totalorder %s32, %s48
      %p50 = scmp.eq.s32.totalorder %s24, 0
      %p51 = por %p49, %p50
      %s53 = sadd.s32 %s52, 1
      %p56 = scmp.eq.s32.totalorder %s18, 1
      %p57 = scmp.ne.s32.totalorder %s52, %s54
      %p58 = scmp.eq.s32.totalorder %s18, 0
      %p59 = por %p57, %p58
      %p60 = scmp.ne.s32.totalorder %s52, %s54
      %p61 = scmp.eq.s32.totalorder %s23, 1
      %p62 = por %p60, %p61
      %p63 = scmp.ne.s32.totalorder %s54, %s55
      %p64 = scmp.eq.s32.totalorder %s23, 0
      %p65 = por %p63, %p64
      %p66 = scmp.ne.s32.totalorder %s54, %s55
      %p67 = scmp.eq.s32.totalorder %s24, 1
      %p68 = por %p66, %p67
      %p70 = scmp.ne.s32.totalorder %s55, %s69
      %p71 = scmp.eq.s32.totalorder %s24, 0
      %p72 = por %p70, %p71
      %s74 = sadd.s32 %s73, 1
      %p77 = scmp.eq.s32.totalorder %s18, 1
      %p78 = scmp.ne.s32.totalorder %s73, %s75
      %p79 = scmp.eq.s32.totalorder %s18, 0
      %p80 = por %p78, %p79
      %p81 = scmp.ne.s32.totalorder %s73, %s75
      %p82 = scmp.eq.s32.totalorder %s23, 1
      %p83 = por %p81, %p82
      %p84 = scmp.ne.s32.totalorder %s75, %s76
      %p85 = scmp.eq.s32.totalorder %s23, 0
      %p86 = por %p84, %p85
      %p87 = scmp.ne.s32.totalorder %s75, %s76
      %p88 = scmp.eq.s32.totalorder %s24, 1
      %p89 = por %p87, %p88
      %p91 = scmp.ne.s32.totalorder %s76, %s90
      %p92 = scmp.eq.s32.totalorder %s24, 0
      %p93 = por %p91, %p92
      %s95 = sadd.s32 %s94, 1
      %p98 = scmp.eq.s32.totalorder %s18, 1
      %p99 = scmp.ne.s32.totalorder %s94, %s96
      %p100 = scmp.eq.s32.totalorder %s18, 0
      %p101 = por %p99, %p100
      %p102 = scmp.ne.s32.totalorder %s94, %s96
      %p103 = scmp.eq.s32.totalorder %s23, 1
      %p104 = por %p102, %p103
      %p105 = scmp.ne.s32.totalorder %s96, %s97
      %p106 = scmp.eq.s32.totalorder %s23, 0
      %p107 = por %p105, %p106
      %p108 = scmp.ne.s32.totalorder %s96, %s97
      %p109 = scmp.eq.s32.totalorder %s24, 1
      %p110 = por %p108, %p109
      %p112 = scmp.ne.s32.totalorder %s97, %s111
      %p113 = scmp.eq.s32.totalorder %s24, 0
      %p114 = por %p112, %p113
      %s116 = sadd.s32 %s115, 1
      %p119 = scmp.eq.s32.totalorder %s18, 1
      %p120 = scmp.ne.s32.totalorder %s115, %s117
      %p121 = scmp.eq.s32.totalorder %s18, 0
      %p122 = por %p120, %p121
      %p123 = scmp.ne.s32.totalorder %s115, %s117
      %p124 = scmp.eq.s32.totalorder %s23, 1
      %p125 = por %p123, %p124
      %p126 = scmp.ne.s32.totalorder %s117, %s118
      %p127 = scmp.eq.s32.totalorder %s23, 0
      %p128 = por %p126, %p127
      %p129 = scmp.ne.s32.totalorder %s117, %s118
      %p130 = scmp.eq.s32.totalorder %s24, 1
      %p131 = por %p129, %p130
      %p133 = scmp.ne.s32.totalorder %s118, %s132
      %p134 = scmp.eq.s32.totalorder %s24, 0
      %p135 = por %p133, %p134
      %s137 = sadd.s32 %s136, 1
      %p140 = scmp.eq.s32.totalorder %s18, 1
      %p141 = scmp.ne.s32.totalorder %s136, %s138
      %p142 = scmp.eq.s32.totalorder %s18, 0
      %p143 = por %p141, %p142
      %p144 = scmp.ne.s32.totalorder %s136, %s138
      %p145 = scmp.eq.s32.totalorder %s23, 1
      %p146 = por %p144, %p145
      %p147 = scmp.ne.s32.totalorder %s138, %s139
      %p148 = scmp.eq.s32.totalorder %s23, 0
      %p149 = por %p147, %p148
      %p150 = scmp.ne.s32.totalorder %s138, %s139
      %p151 = scmp.eq.s32.totalorder %s24, 1
      %p152 = por %p150, %p151
      %p154 = scmp.ne.s32.totalorder %s139, %s153
      %p155 = scmp.eq.s32.totalorder %s24, 0
      %p156 = por %p154, %p155
      %s158 = sadd.s32 %s157, 1
      %p161 = scmp.eq.s32.totalorder %s18, 1
      %p162 = scmp.ne.s32.totalorder %s157, %s159
      %p163 = scmp.eq.s32.totalorder %s18, 0
      %p164 = por %p162, %p163
      %p165 = scmp.ne.s32.totalorder %s157, %s159
      %p166 = scmp.eq.s32.totalorder %s23, 1
      %p167 = por %p165, %p166
      %p168 = scmp.ne.s32.totalorder %s159, %s160
      %p169 = scmp.eq.s32.totalorder %s23, 0
      %p170 = por %p168, %p169
      %p171 = scmp.ne.s32.totalorder %s159, %s160
      %p172 = scmp.eq.s32.totalorder %s24, 1
      %p173 = por %p171, %p172
      %p175 = scmp.ne.s32.totalorder %s160, %s174
      %p176 = scmp.eq.s32.totalorder %s24, 0
      %p177 = por %p175, %p176
      %s178 = ssub.s32 %s18, %s25
      %p179 = scmp.eq.s32.totalorder %s178, 0
      %s181 = sadd.s32 %s180, 1
      %s182 = scalar_select %p179, %s180, %s181
      %p185 = pneg %p179
      %p186 = scmp.eq.s32.totalorder %s18, 1
      %p187 = por %p185, %p186
      %p188 = scmp.ne.s32.totalorder %s180, %s183
      %p189 = scmp.eq.s32.totalorder %s18, 0
      %p190 = por %p188, %p189
      %p191 = scmp.ne.s32.totalorder %s180, %s183
      %p192 = scmp.eq.s32.totalorder %s23, 1
      %p193 = por %p191, %p192
      %p194 = scmp.ne.s32.totalorder %s183, %s184
      %p195 = scmp.eq.s32.totalorder %s23, 0
      %p196 = por %p194, %p195
      %p197 = scmp.ne.s32.totalorder %s183, %s184
      %p198 = scmp.eq.s32.totalorder %s24, 1
      %p199 = por %p197, %p198
      %p201 = scmp.ne.s32.totalorder %s184, %s200
      %p202 = scmp.eq.s32.totalorder %s24, 0
      %p203 = por %p201, %p202
      %p204 = scmp.le.s32.totalorder 1, %s18
      %p205 = scmp.lt.s32.totalorder %s18, 3
      %p206 = pnand %p204, %p205
      %p207 = pneg %p206
      // Predicated region
      $region9: #{tpu_custom_call.1} parent=5 // pred_check
        _
      $region10: #{tpu_custom_call.1} parent=5 // pred_check_branch
        %209 = sbr.rel (%p206) target = $region12
      $region11: #{tpu_custom_call.1} parent=5 // pred_region
        %s210 = ssub.s32 %s18, 1
        // Predicated region
        $region13: #{tpu_custom_call.1} parent=11 // pred_check
          %p211 = pneg %p65
        $region14: #{tpu_custom_call.1} parent=11 // pred_check_branch
          %213 = sbr.rel (%p211) target = $region16
        $region15: #{tpu_custom_call.1} parent=11 // pred_region
          _
        $region16: #{tpu_custom_call.1} parent=11 // pred_fallthru
          _
        // Predicated region
        $region17: #{tpu_custom_call.1} parent=11 // pred_check
          %p214 = pneg %p86
        $region18: #{tpu_custom_call.1} parent=11 // pred_check_branch
          %216 = sbr.rel (%p214) target = $region20
        $region19: #{tpu_custom_call.1} parent=11 // pred_region
          _
        $region20: #{tpu_custom_call.1} parent=11 // pred_fallthru
          _
        // Predicated region
        $region21: #{tpu_custom_call.1} parent=11 // pred_check
          %p217 = pneg %p107
        $region22: #{tpu_custom_call.1} parent=11 // pred_check_branch
          %219 = sbr.rel (%p217) target = $region24
        $region23: #{tpu_custom_call.1} parent=11 // pred_region
          _
        $region24: #{tpu_custom_call.1} parent=11 // pred_fallthru
          _
        // Predicated region
        $region25: #{tpu_custom_call.1} parent=11 // pred_check
          %p220 = pneg %p128
        $region26: #{tpu_custom_call.1} parent=11 // pred_check_branch
          %222 = sbr.rel (%p220) target = $region28
        $region27: #{tpu_custom_call.1} parent=11 // pred_region
          _
        $region28: #{tpu_custom_call.1} parent=11 // pred_fallthru
          _
        // Predicated region
        $region29: #{tpu_custom_call.1} parent=11 // pred_check
          %p223 = pneg %p149
        $region30: #{tpu_custom_call.1} parent=11 // pred_check_branch
          %225 = sbr.rel (%p223) target = $region32
        $region31: #{tpu_custom_call.1} parent=11 // pred_region
          _
        $region32: #{tpu_custom_call.1} parent=11 // pred_fallthru
          _
        // Predicated region
        $region33: #{tpu_custom_call.1} parent=11 // pred_check
          %p226 = pneg %p170
        $region34: #{tpu_custom_call.1} parent=11 // pred_check_branch
          %228 = sbr.rel (%p226) target = $region36
        $region35: #{tpu_custom_call.1} parent=11 // pred_region
          _
        $region36: #{tpu_custom_call.1} parent=11 // pred_fallthru
          _
      $region12: #{tpu_custom_call.1} parent=5 // pred_fallthru
        _
      %p229 = scmp.lt.s32.totalorder %s18, 2
      // Predicated region
      $region37: #{tpu_custom_call.1} parent=5 // pred_check
        %p230 = pneg %p229
      $region38: #{tpu_custom_call.1} parent=5 // pred_check_branch
        %232 = sbr.rel (%p230) target = $region40
      $region39: #{tpu_custom_call.1} parent=5 // pred_region
        // Predicated region
        $region41: #{tpu_custom_call.1} parent=39 // pred_check
          %p233 = pneg %p38
        $region42: #{tpu_custom_call.1} parent=39 // pred_check_branch
          %235 = sbr.rel (%p233) target = $region44
        $region43: #{tpu_custom_call.1} parent=39 // pred_region
          %s236 = smul.u32 32, %s18
          %s237 = ssub.s32 48, %s236
          %p238 = scmp.lt.s32.totalorder %s237, 32
          %s239 = scalar_select %p238, %s237, 32
          %s240 = smul.u32 64, %s239
          %p241 = scmp.lt.s32.totalorder %s236, 47
          %s242 = scalar_select %p241, %s236, 47
          %s243 = smul.addr %s242, 4
          %s244 = scalar_lea.vmem %s0, %s243
          %s245 = smul.u32 32, %s18
          %s246 = ssub.s32 48, %s245
          %p247 = scmp.lt.s32.totalorder %s246, 32
          %s248 = scalar_select %p247, %s246, 32
          %s249 = smul.u32 64, %s248
        $region44: #{tpu_custom_call.1} parent=39 // pred_fallthru
          _
      $region40: #{tpu_custom_call.1} parent=5 // pred_fallthru
        _
      %p250 = scmp.le.s32.totalorder 1, %s18
      %p251 = scmp.lt.s32.totalorder %s18, 3
      %p252 = pnand %p250, %p251
      %p253 = pneg %p252
      // Predicated region
      $region45: #{tpu_custom_call.1} parent=5 // pred_check
        _
      $region46: #{tpu_custom_call.1} parent=5 // pred_check_branch
        %255 = sbr.rel (%p252) target = $region48
      $region47: #{tpu_custom_call.1} parent=5 // pred_region
        %s256 = ssub.s32 %s18, 1
        %s257 = smul.u32 32, %s23
        %s258 = ssub.s32 48, %s257
        %p259 = scmp.lt.s32.totalorder %s258, 32
        %s260 = scalar_select %p259, %s258, 32
        %s261 = smul.u32 64, %s260
        %p262 = scmp.lt.s32.totalorder %s257, 47
        %s263 = scalar_select %p262, %s257, 47
        %s264 = smul.addr %s263, 4
        %s265 = scalar_lea.vmem %s0, %s264
        %p266 = pneg %p44
        %p267 = pneg %p41
        %p268 = pneg %p65
        %p269 = pneg %p62
        %p270 = pneg %p86
        %p271 = pneg %p83
        %p272 = pneg %p107
        %p273 = pneg %p104
        %p274 = pneg %p128
        %p275 = pneg %p125
        %p276 = pneg %p149
        %p277 = pneg %p146
        %p278 = pneg %p170
        %p279 = pneg %p167
        %p280 = pneg %p196
        %p281 = pneg %p193
        %s282 = sand.u32 %s183, 1
        %s283 = scalar_lea.sflag [#allocation4], %s282
        %s284 = sand.u32 %s183, 1
        %s285 = smul.addr %s284, 2
        %s286 = scalar_lea.vmem [#allocation3], %s285
        %s287 = smul.u32 32, %s23
        %s288 = ssub.s32 48, %s287
        %p289 = scmp.lt.s32.totalorder %s288, 32
        %s290 = scalar_select %p289, %s288, 32
        %s291 = smul.u32 64, %s290
        %p292 = scmp.lt.s32.totalorder %s287, 47
        %s293 = scalar_select %p292, %s287, 47
        %s294 = smul.addr %s293, 4
        %s295 = scalar_lea.vmem %s0, %s294
        %s296 = smul.u32 32, %s23
        %s297 = ssub.s32 48, %s296
        %p298 = scmp.lt.s32.totalorder %s297, 32
        %s299 = scalar_select %p298, %s297, 32
        %s300 = smul.u32 64, %s299
        %s301 = smul.u32 2, %s23
        %v303 = vld [vmem:[%s295] sm:$0xf]
        %v304 = vld [vmem:[%s295 + $0x4] sm:$0xf]
        %v305 = vld [vmem:[%s295 + $0x8] sm:$0xf]
        %v306 = vld [vmem:[%s295 + $0xc] sm:$0xf]
        %v307 = vld [vmem:[%s295 + $0x10] sm:$0xf]
        %v308 = vld [vmem:[%s295 + $0x14] sm:$0xf]
        %v309 = vld [vmem:[%s295 + $0x18] sm:$0xf]
        %v310 = vld [vmem:[%s295 + $0x1c] sm:$0xf]
        %v311 = vld [vmem:[%s295 + $0x20] sm:$0xf]
        %v312 = vld [vmem:[%s295 + $0x24] sm:$0xf]
        %v313 = vld [vmem:[%s295 + $0x28] sm:$0xf]
        %v314 = vld [vmem:[%s295 + $0x2c] sm:$0xf]
        %v315 = vld [vmem:[%s295 + $0x30] sm:$0xf]
        %v316 = vld [vmem:[%s295 + $0x34] sm:$0xf]
        %v317 = vld [vmem:[%s295 + $0x38] sm:$0xf]
        %v318 = vld [vmem:[%s295 + $0x3c] sm:$0xf]
        %v319 = vld [vmem:[%s295 + $0x40] sm:$0xf]
        %v320 = vld [vmem:[%s295 + $0x44] sm:$0xf]
        %v321 = vld [vmem:[%s295 + $0x48] sm:$0xf]
        %v322 = vld [vmem:[%s295 + $0x4c] sm:$0xf]
        %v323 = vld [vmem:[%s295 + $0x50] sm:$0xf]
        %v324 = vld [vmem:[%s295 + $0x54] sm:$0xf]
        %v325 = vld [vmem:[%s295 + $0x58] sm:$0xf]
        %v326 = vld [vmem:[%s295 + $0x5c] sm:$0xf]
        %v327 = vld [vmem:[%s295 + $0x60] sm:$0xf]
        %v328 = vld [vmem:[%s295 + $0x64] sm:$0xf]
        %v329 = vld [vmem:[%s295 + $0x68] sm:$0xf]
        %v330 = vld [vmem:[%s295 + $0x6c] sm:$0xf]
        %v331 = vld [vmem:[%s295 + $0x70] sm:$0xf]
        %v332 = vld [vmem:[%s295 + $0x74] sm:$0xf]
        %v333 = vld [vmem:[%s295 + $0x78] sm:$0xf]
        %v334 = vld [vmem:[%s295 + $0x7c] sm:$0xf]
        %v335 = vld [vmem:[%s1] sm:$0xf]
        %v336 = vld [vmem:[%s1 + $0x4] sm:$0xf]
        %v337 = vld [vmem:[%s1 + $0x8] sm:$0xf]
        %v338 = vld [vmem:[%s2] sm:$0x1]
        %v340 = vlaneseq
        %v341 = vshrl.u32 %v340, 7
        %v342 = vsub.s32 0, %v341
        %v343 = vrot.slane %v338, %v342
        %v377 = vunpack.c.l.b16 %v303
        %v378 = vunpack.c.l.b16 %v304
        %v379 = vunpack.c.l.b16 %v305
        %v380 = vunpack.c.l.b16 %v306
        %v381 = vunpack.c.l.b16 %v307
        %v382 = vunpack.c.l.b16 %v308
        %v383 = vunpack.c.l.b16 %v309
        %v384 = vunpack.c.l.b16 %v310
        %v385 = vunpack.c.l.b16 %v311
        %v386 = vunpack.c.l.b16 %v312
        %v387 = vunpack.c.l.b16 %v313
        %v388 = vunpack.c.l.b16 %v314
        %v389 = vunpack.c.l.b16 %v315
        %v390 = vunpack.c.l.b16 %v316
        %v391 = vunpack.c.l.b16 %v317
        %v392 = vunpack.c.l.b16 %v318
        %v393 = vunpack.c.l.b16 %v319
        %v394 = vunpack.c.l.b16 %v320
        %v395 = vunpack.c.l.b16 %v321
        %v396 = vunpack.c.l.b16 %v322
        %v397 = vunpack.c.l.b16 %v323
        %v398 = vunpack.c.l.b16 %v324
        %v399 = vunpack.c.l.b16 %v325
        %v400 = vunpack.c.l.b16 %v326
        %v401 = vunpack.c.l.b16 %v327
        %v402 = vunpack.c.l.b16 %v328
        %v403 = vunpack.c.l.b16 %v329
        %v404 = vunpack.c.l.b16 %v330
        %v405 = vunpack.c.l.b16 %v331
        %v406 = vunpack.c.l.b16 %v332
        %v407 = vunpack.c.l.b16 %v333
        %v408 = vunpack.c.l.b16 %v334
        %v409 = vpack.c.b16 %v378, %v377
        %v410 = vpack.c.b16 %v380, %v379
        %v411 = vpack.c.b16 %v382, %v381
        %v412 = vpack.c.b16 %v384, %v383
        %v413 = vpack.c.b16 %v386, %v385
        %v414 = vpack.c.b16 %v388, %v387
        %v415 = vpack.c.b16 %v390, %v389
        %v416 = vpack.c.b16 %v392, %v391
        %v417 = vpack.c.b16 %v394, %v393
        %v418 = vpack.c.b16 %v396, %v395
        %v419 = vpack.c.b16 %v398, %v397
        %v420 = vpack.c.b16 %v400, %v399
        %v421 = vpack.c.b16 %v402, %v401
        %v422 = vpack.c.b16 %v404, %v403
        %v423 = vpack.c.b16 %v406, %v405
        %v424 = vpack.c.b16 %v408, %v407
        %v428 = vunpack.c.l.b16 %v335
        %v429 = vunpack.c.l.b16 %v336
        %v430 = vunpack.c.l.b16 %v337
        %v431 = vpack.c.b16 %v429, %v428
        %v432 = vpack.c.b16 %v430, %v430
        %vm434 = vcmask 195584
        %v436 = vsel %vm434, %v409, 0
        %v439 = vsel %vm434, %v410, 0
        %v442 = vsel %vm434, %v411, 0
        %v445 = vsel %vm434, %v412, 0
        %v448 = vsel %vm434, %v413, 0
        %v451 = vsel %vm434, %v414, 0
        %v454 = vsel %vm434, %v415, 0
        %v457 = vsel %vm434, %v416, 0
        %v460 = vsel %vm434, %v417, 0
        %v463 = vsel %vm434, %v418, 0
        %v466 = vsel %vm434, %v419, 0
        %v469 = vsel %vm434, %v420, 0
        %v472 = vsel %vm434, %v421, 0
        %v475 = vsel %vm434, %v422, 0
        %v478 = vsel %vm434, %v423, 0
        %v481 = vsel %vm434, %v424, 0
        %vm483 = vcmask 1043456
        %v485 = vsel %vm483, %v432, 0
        %487 = vmatprep.subr.bf16.mxu0 0
        %488 = vmatpush1.bf16.msra.mxu0 %v431
        %489 = vmatprep.subr.bf16.mxu0 0
        %490 = vmatpush1.bf16.msra.mxu0 %v485
        %491 = vmatprep.subr.bf16.mxu0 0
        %492 = vmatpush1.bf16.msra.mxu0 0
        %493 = vmatprep.subr.bf16.mxu0 0
        %494 = vmatpush1.bf16.msra.mxu0 0
        %495 = vmatprep.subr.bf16.mxu0 0
        %496 = vmatpush1.bf16.msra.mxu0 0
        %497 = vmatprep.subr.bf16.mxu0 0
        %498 = vmatpush1.bf16.msra.mxu0 0
        %499 = vmatprep.subr.bf16.mxu0 0
        %500 = vmatpush1.bf16.msra.mxu0 0
        %501 = vmatprep.subr.bf16.mxu0 0
        %502 = vmatpush1.bf16.msra.mxu0 0
        %503 = vmatprep.subr.bf16.mxu0 0
        %504 = vmatpush1.bf16.msra.mxu0 0
        %505 = vmatprep.subr.bf16.mxu0 0
        %506 = vmatpush1.bf16.msra.mxu0 0
        %507 = vmatprep.subr.bf16.mxu0 0
        %508 = vmatpush1.bf16.msra.mxu0 0
        %509 = vmatprep.subr.bf16.mxu0 0
        %510 = vmatpush1.bf16.msra.mxu0 0
        %511 = vmatprep.subr.bf16.mxu0 0
        %512 = vmatpush1.bf16.msra.mxu0 0
        %513 = vmatprep.subr.bf16.mxu0 0
        %514 = vmatpush1.bf16.msra.mxu0 0
        %515 = vmatprep.subr.bf16.mxu0 0
        %516 = vmatpush1.bf16.msra.mxu0 0
        %517 = vmatprep.subr.bf16.mxu0 0
        %518 = vmatpush1.bf16.msra.mxu0 0
        %519 = vmatprep.mubr.bf16.mxu0 0
        %520 = vmatmul.mubr.bf16.gmra.mrb[0].mxu0 %v436
        %v521 = vpop.f32.mrb[0].mxu0
        %v522 = vadd.f32 %v343, %v521
        %v523 = vpop.f32.mrb[0].mxu0
        %v524 = vpop.f32.mrb[0].mxu0
        %v525 = vadd.f32 %v343, %v524
        %v526 = vpop.f32.mrb[0].mxu0
        %527 = vmatprep.mubr.bf16.mxu0 0
        %528 = vmatmul.mubr.bf16.gmra.mrb[0].mxu0 %v439
        %v529 = vpop.f32.mrb[0].mxu0
        %v530 = vadd.f32 %v343, %v529
        %v531 = vpop.f32.mrb[0].mxu0
        %v532 = vpop.f32.mrb[0].mxu0
        %v533 = vadd.f32 %v343, %v532
        %v534 = vpop.f32.mrb[0].mxu0
        %535 = vmatprep.mubr.bf16.mxu0 0
        %536 = vmatmul.mubr.bf16.gmra.mrb[0].mxu0 %v442
        %v537 = vpop.f32.mrb[0].mxu0
        %v538 = vadd.f32 %v343, %v537
        %v539 = vpop.f32.mrb[0].mxu0
        %v540 = vpop.f32.mrb[0].mxu0
        %v541 = vadd.f32 %v343, %v540
        %v542 = vpop.f32.mrb[0].mxu0
        %543 = vmatprep.mubr.bf16.mxu0 0
        %544 = vmatmul.mubr.bf16.gmra.mrb[0].mxu0 %v445
        %v545 = vpop.f32.mrb[0].mxu0
        %v546 = vadd.f32 %v343, %v545
        %v547 = vpop.f32.mrb[0].mxu0
        %v548 = vpop.f32.mrb[0].mxu0
        %v549 = vadd.f32 %v343, %v548
        %v550 = vpop.f32.mrb[0].mxu0
        %551 = vmatprep.mubr.bf16.mxu0 0
        %552 = vmatmul.mubr.bf16.gmra.mrb[0].mxu0 %v448
        %v553 = vpop.f32.mrb[0].mxu0
        %v554 = vadd.f32 %v343, %v553
        %v555 = vpop.f32.mrb[0].mxu0
        %v556 = vpop.f32.mrb[0].mxu0
        %v557 = vadd.f32 %v343, %v556
        %v558 = vpop.f32.mrb[0].mxu0
        %559 = vmatprep.mubr.bf16.mxu0 0
        %560 = vmatmul.mubr.bf16.gmra.mrb[0].mxu0 %v451
        %v561 = vpop.f32.mrb[0].mxu0
        %v562 = vadd.f32 %v343, %v561
        %v563 = vpop.f32.mrb[0].mxu0
        %v564 = vpop.f32.mrb[0].mxu0
        %v565 = vadd.f32 %v343, %v564
        %v566 = vpop.f32.mrb[0].mxu0
        %567 = vmatprep.mubr.bf16.mxu0 0
        %568 = vmatmul.mubr.bf16.gmra.mrb[0].mxu0 %v454
        %v569 = vpop.f32.mrb[0].mxu0
        %v570 = vadd.f32 %v343, %v569
        %v571 = vpop.f32.mrb[0].mxu0
        %v572 = vpop.f32.mrb[0].mxu0
        %v573 = vadd.f32 %v343, %v572
        %v574 = vpop.f32.mrb[0].mxu0
        %575 = vmatprep.mubr.bf16.mxu0 0
        %576 = vmatmul.mubr.bf16.gmra.mrb[0].mxu0 %v457
        %v577 = vpop.f32.mrb[0].mxu0
        %v578 = vadd.f32 %v343, %v577
        %v579 = vpop.f32.mrb[0].mxu0
        %v580 = vpop.f32.mrb[0].mxu0
        %v581 = vadd.f32 %v343, %v580
        %v582 = vpop.f32.mrb[0].mxu0
        %583 = vmatprep.mubr.bf16.mxu0 0
        %584 = vmatmul.mubr.bf16.gmra.mrb[0].mxu0 %v460
        %v585 = vpop.f32.mrb[0].mxu0
        %v586 = vadd.f32 %v343, %v585
        %v587 = vpop.f32.mrb[0].mxu0
        %v588 = vpop.f32.mrb[0].mxu0
        %v589 = vadd.f32 %v343, %v588
        %v590 = vpop.f32.mrb[0].mxu0
        %591 = vmatprep.mubr.bf16.mxu0 0
        %592 = vmatmul.mubr.bf16.gmra.mrb[0].mxu0 %v463
        %v593 = vpop.f32.mrb[0].mxu0
        %v594 = vadd.f32 %v343, %v593
        %v595 = vpop.f32.mrb[0].mxu0
        %v596 = vpop.f32.mrb[0].mxu0
        %v597 = vadd.f32 %v343, %v596
        %v598 = vpop.f32.mrb[0].mxu0
        %599 = vmatprep.mubr.bf16.mxu0 0
        %600 = vmatmul.mubr.bf16.gmra.mrb[0].mxu0 %v466
        %v601 = vpop.f32.mrb[0].mxu0
        %v602 = vadd.f32 %v343, %v601
        %v603 = vpop.f32.mrb[0].mxu0
        %v604 = vpop.f32.mrb[0].mxu0
        %v605 = vadd.f32 %v343, %v604
        %v606 = vpop.f32.mrb[0].mxu0
        %607 = vmatprep.mubr.bf16.mxu0 0
        %608 = vmatmul.mubr.bf16.gmra.mrb[0].mxu0 %v469
        %v609 = vpop.f32.mrb[0].mxu0
        %v610 = vadd.f32 %v343, %v609
        %v611 = vpop.f32.mrb[0].mxu0
        %v612 = vpop.f32.mrb[0].mxu0
        %v613 = vadd.f32 %v343, %v612
        %v614 = vpop.f32.mrb[0].mxu0
        %615 = vmatprep.mubr.bf16.mxu0 0
        %616 = vmatmul.mubr.bf16.gmra.mrb[0].mxu0 %v472
        %v617 = vpop.f32.mrb[0].mxu0
        %v618 = vadd.f32 %v343, %v617
        %v619 = vpop.f32.mrb[0].mxu0
        %v620 = vpop.f32.mrb[0].mxu0
        %v621 = vadd.f32 %v343, %v620
        %v622 = vpop.f32.mrb[0].mxu0
        %623 = vmatprep.mubr.bf16.mxu0 0
        %624 = vmatmul.mubr.bf16.gmra.mrb[0].mxu0 %v475
        %v625 = vpop.f32.mrb[0].mxu0
        %v626 = vadd.f32 %v343, %v625
        %v627 = vpop.f32.mrb[0].mxu0
        %v628 = vpop.f32.mrb[0].mxu0
        %v629 = vadd.f32 %v343, %v628
        %v630 = vpop.f32.mrb[0].mxu0
        %631 = vmatprep.mubr.bf16.mxu0 0
        %632 = vmatmul.mubr.bf16.gmra.mrb[0].mxu0 %v478
        %v633 = vpop.f32.mrb[0].mxu0
        %v634 = vadd.f32 %v343, %v633
        %v635 = vpop.f32.mrb[0].mxu0
        %v636 = vpop.f32.mrb[0].mxu0
        %v637 = vadd.f32 %v343, %v636
        %v638 = vpop.f32.mrb[0].mxu0
        %639 = vmatprep.mubr.bf16.mxu0 0
        %640 = vmatmul.mubr.bf16.gmra.mrb[0].mxu0 %v481
        %v641 = vpop.f32.mrb[0].mxu0
        %v642 = vadd.f32 %v343, %v641
        %v643 = vpop.f32.mrb[0].mxu0
        %v644 = vpop.f32.mrb[0].mxu0
        %v645 = vadd.f32 %v343, %v644
        %v646 = vpop.f32.mrb[0].mxu0
        %647 = vdwg.mxu0
        %v648 = vmax.f32 %v522, 0.0
        %v649 = vmax.f32 %v525, 0.0
        %v650 = vmax.f32 %v530, 0.0
        %v651 = vmax.f32 %v533, 0.0
        %v652 = vmax.f32 %v538, 0.0
        %v653 = vmax.f32 %v541, 0.0
        %v654 = vmax.f32 %v546, 0.0
        %v655 = vmax.f32 %v549, 0.0
        %v656 = vmax.f32 %v554, 0.0
        %v657 = vmax.f32 %v557, 0.0
        %v658 = vmax.f32 %v562, 0.0
        %v659 = vmax.f32 %v565, 0.0
        %v660 = vmax.f32 %v570, 0.0
        %v661 = vmax.f32 %v573, 0.0
        %v662 = vmax.f32 %v578, 0.0
        %v663 = vmax.f32 %v581, 0.0
        %v664 = vmax.f32 %v586, 0.0
        %v665 = vmax.f32 %v589, 0.0
        %v666 = vmax.f32 %v594, 0.0
        %v667 = vmax.f32 %v597, 0.0
        %v668 = vmax.f32 %v602, 0.0
        %v669 = vmax.f32 %v605, 0.0
        %v670 = vmax.f32 %v610, 0.0
        %v671 = vmax.f32 %v613, 0.0
        %v672 = vmax.f32 %v618, 0.0
        %v673 = vmax.f32 %v621, 0.0
        %v674 = vmax.f32 %v626, 0.0
        %v675 = vmax.f32 %v629, 0.0
        %v676 = vmax.f32 %v634, 0.0
        %v677 = vmax.f32 %v637, 0.0
        %v678 = vmax.f32 %v642, 0.0
        %v679 = vmax.f32 %v645, 0.0
        %v680 = vld [vmem:[%s3] sm:$0xf]
        %v681 = vld [vmem:[%s3 + $0x4] sm:$0xf]
        %v682 = vld [vmem:[%s3 + $0x8] sm:$0xf]
        %v683 = vld [vmem:[%s3 + $0xc] sm:$0xf]
        %v684 = vld [vmem:[%s4] sm:$0x1]
        %v685 = vpack.c.bf16 %v649, %v648
        %v686 = vpack.c.bf16 %v651, %v650
        %v687 = vpack.c.bf16 %v653, %v652
        %v688 = vpack.c.bf16 %v655, %v654
        %v689 = vpack.c.bf16 %v657, %v656
        %v690 = vpack.c.bf16 %v659, %v658
        %v691 = vpack.c.bf16 %v661, %v660
        %v692 = vpack.c.bf16 %v663, %v662
        %v693 = vpack.c.bf16 %v665, %v664
        %v694 = vpack.c.bf16 %v667, %v666
        %v695 = vpack.c.bf16 %v669, %v668
        %v696 = vpack.c.bf16 %v671, %v670
        %v697 = vpack.c.bf16 %v673, %v672
        %v698 = vpack.c.bf16 %v675, %v674
        %v699 = vpack.c.bf16 %v677, %v676
        %v700 = vpack.c.bf16 %v679, %v678
        %v702 = vlaneseq
        %v703 = vshrl.u32 %v702, 7
        %v704 = vsub.s32 0, %v703
        %v705 = vrot.slane %v684, %v704
        %v711 = vunpack.c.l.b16 %v680
        %v712 = vunpack.c.l.b16 %v681
        %v713 = vunpack.c.l.b16 %v682
        %v714 = vunpack.c.l.b16 %v683
        %v715 = vpack.c.b16 %v712, %v711
        %v716 = vpack.c.b16 %v714, %v713
        %vm719 = vcmask 261120
        %v721 = vsel %vm719, %v685, 0
        %v724 = vsel %vm719, %v686, 0
        %v727 = vsel %vm719, %v687, 0
        %v730 = vsel %vm719, %v688, 0
        %v733 = vsel %vm719, %v689, 0
        %v736 = vsel %vm719, %v690, 0
        %v739 = vsel %vm719, %v691, 0
        %v742 = vsel %vm719, %v692, 0
        %v745 = vsel %vm719, %v693, 0
        %v748 = vsel %vm719, %v694, 0
        %v751 = vsel %vm719, %v695, 0
        %v754 = vsel %vm719, %v696, 0
        %v757 = vsel %vm719, %v697, 0
        %v760 = vsel %vm719, %v698, 0
        %v763 = vsel %vm719, %v699, 0
        %v766 = vsel %vm719, %v700, 0
        %768 = vmatprep.subr.bf16.mxu0 0
        %769 = vmatpush1.bf16.msra.mxu0 %v715
        %770 = vmatprep.subr.bf16.mxu0 0
        %771 = vmatpush1.bf16.msra.mxu0 %v716
        %772 = vmatprep.subr.bf16.mxu0 0
        %773 = vmatpush1.bf16.msra.mxu0 0
        %774 = vmatprep.subr.bf16.mxu0 0
        %775 = vmatpush1.bf16.msra.mxu0 0
        %776 = vmatprep.subr.bf16.mxu0 0
        %777 = vmatpush1.bf16.msra.mxu0 0
        %778 = vmatprep.subr.bf16.mxu0 0
        %779 = vmatpush1.bf16.msra.mxu0 0
        %780 = vmatprep.subr.bf16.mxu0 0
        %781 = vmatpush1.bf16.msra.mxu0 0
        %782 = vmatprep.subr.bf16.mxu0 0
        %783 = vmatpush1.bf16.msra.mxu0 0
        %784 = vmatprep.subr.bf16.mxu0 0
        %785 = vmatpush1.bf16.msra.mxu0 0
        %786 = vmatprep.subr.bf16.mxu0 0
        %787 = vmatpush1.bf16.msra.mxu0 0
        %788 = vmatprep.subr.bf16.mxu0 0
        %789 = vmatpush1.bf16.msra.mxu0 0
        %790 = vmatprep.subr.bf16.mxu0 0
        %791 = vmatpush1.bf16.msra.mxu0 0
        %792 = vmatprep.subr.bf16.mxu0 0
        %793 = vmatpush1.bf16.msra.mxu0 0
        %794 = vmatprep.subr.bf16.mxu0 0
        %795 = vmatpush1.bf16.msra.mxu0 0
        %796 = vmatprep.subr.bf16.mxu0 0
        %797 = vmatpush1.bf16.msra.mxu0 0
        %798 = vmatprep.subr.bf16.mxu0 0
        %799 = vmatpush1.bf16.msra.mxu0 0
        %800 = vmatprep.mubr.bf16.mxu0 0
        %801 = vmatmul.mubr.bf16.gmra.mrb[0].mxu0 %v721
        %v802 = vpop.f32.mrb[0].mxu0
        %v803 = vadd.f32 %v705, %v802
        %v804 = vpop.f32.mrb[0].mxu0
        %v805 = vpop.f32.mrb[0].mxu0
        %v806 = vadd.f32 %v705, %v805
        %v807 = vpop.f32.mrb[0].mxu0
        %808 = vmatprep.mubr.bf16.mxu0 0
        %809 = vmatmul.mubr.bf16.gmra.mrb[0].mxu0 %v724
        %v810 = vpop.f32.mrb[0].mxu0
        %v811 = vadd.f32 %v705, %v810
        %v812 = vpop.f32.mrb[0].mxu0
        %v813 = vpop.f32.mrb[0].mxu0
        %v814 = vadd.f32 %v705, %v813
        %v815 = vpop.f32.mrb[0].mxu0
        %816 = vmatprep.mubr.bf16.mxu0 0
        %817 = vmatmul.mubr.bf16.gmra.mrb[0].mxu0 %v727
        %v818 = vpop.f32.mrb[0].mxu0
        %v819 = vadd.f32 %v705, %v818
        %v820 = vpop.f32.mrb[0].mxu0
        %v821 = vpop.f32.mrb[0].mxu0
        %v822 = vadd.f32 %v705, %v821
        %v823 = vpop.f32.mrb[0].mxu0
        %824 = vmatprep.mubr.bf16.mxu0 0
        %825 = vmatmul.mubr.bf16.gmra.mrb[0].mxu0 %v730
        %v826 = vpop.f32.mrb[0].mxu0
        %v827 = vadd.f32 %v705, %v826
        %v828 = vpop.f32.mrb[0].mxu0
        %v829 = vpop.f32.mrb[0].mxu0
        %v830 = vadd.f32 %v705, %v829
        %v831 = vpop.f32.mrb[0].mxu0
        %832 = vmatprep.mubr.bf16.mxu0 0
        %833 = vmatmul.mubr.bf16.gmra.mrb[0].mxu0 %v733
        %v834 = vpop.f32.mrb[0].mxu0
        %v835 = vadd.f32 %v705, %v834
        %v836 = vpop.f32.mrb[0].mxu0
        %v837 = vpop.f32.mrb[0].mxu0
        %v838 = vadd.f32 %v705, %v837
        %v839 = vpop.f32.mrb[0].mxu0
        %840 = vmatprep.mubr.bf16.mxu0 0
        %841 = vmatmul.mubr.bf16.gmra.mrb[0].mxu0 %v736
        %v842 = vpop.f32.mrb[0].mxu0
        %v843 = vadd.f32 %v705, %v842
        %v844 = vpop.f32.mrb[0].mxu0
        %v845 = vpop.f32.mrb[0].mxu0
        %v846 = vadd.f32 %v705, %v845
        %v847 = vpop.f32.mrb[0].mxu0
        %848 = vmatprep.mubr.bf16.mxu0 0
        %849 = vmatmul.mubr.bf16.gmra.mrb[0].mxu0 %v739
        %v850 = vpop.f32.mrb[0].mxu0
        %v851 = vadd.f32 %v705, %v850
        %v852 = vpop.f32.mrb[0].mxu0
        %v853 = vpop.f32.mrb[0].mxu0
        %v854 = vadd.f32 %v705, %v853
        %v855 = vpop.f32.mrb[0].mxu0
        %856 = vmatprep.mubr.bf16.mxu0 0
        %857 = vmatmul.mubr.bf16.gmra.mrb[0].mxu0 %v742
        %v858 = vpop.f32.mrb[0].mxu0
        %v859 = vadd.f32 %v705, %v858
        %v860 = vpop.f32.mrb[0].mxu0
        %v861 = vpop.f32.mrb[0].mxu0
        %v862 = vadd.f32 %v705, %v861
        %v863 = vpop.f32.mrb[0].mxu0
        %864 = vmatprep.mubr.bf16.mxu0 0
        %865 = vmatmul.mubr.bf16.gmra.mrb[0].mxu0 %v745
        %v866 = vpop.f32.mrb[0].mxu0
        %v867 = vadd.f32 %v705, %v866
        %v868 = vpop.f32.mrb[0].mxu0
        %v869 = vpop.f32.mrb[0].mxu0
        %v870 = vadd.f32 %v705, %v869
        %v871 = vpop.f32.mrb[0].mxu0
        %872 = vmatprep.mubr.bf16.mxu0 0
        %873 = vmatmul.mubr.bf16.gmra.mrb[0].mxu0 %v748
        %v874 = vpop.f32.mrb[0].mxu0
        %v875 = vadd.f32 %v705, %v874
        %v876 = vpop.f32.mrb[0].mxu0
        %v877 = vpop.f32.mrb[0].mxu0
        %v878 = vadd.f32 %v705, %v877
        %v879 = vpop.f32.mrb[0].mxu0
        %880 = vmatprep.mubr.bf16.mxu0 0
        %881 = vmatmul.mubr.bf16.gmra.mrb[0].mxu0 %v751
        %v882 = vpop.f32.mrb[0].mxu0
        %v883 = vadd.f32 %v705, %v882
        %v884 = vpop.f32.mrb[0].mxu0
        %v885 = vpop.f32.mrb[0].mxu0
        %v886 = vadd.f32 %v705, %v885
        %v887 = vpop.f32.mrb[0].mxu0
        %888 = vmatprep.mubr.bf16.mxu0 0
        %889 = vmatmul.mubr.bf16.gmra.mrb[0].mxu0 %v754
        %v890 = vpop.f32.mrb[0].mxu0
        %v891 = vadd.f32 %v705, %v890
        %v892 = vpop.f32.mrb[0].mxu0
        %v893 = vpop.f32.mrb[0].mxu0
        %v894 = vadd.f32 %v705, %v893
        %v895 = vpop.f32.mrb[0].mxu0
        %896 = vmatprep.mubr.bf16.mxu0 0
        %897 = vmatmul.mubr.bf16.gmra.mrb[0].mxu0 %v757
        %v898 = vpop.f32.mrb[0].mxu0
        %v899 = vadd.f32 %v705, %v898
        %v900 = vpop.f32.mrb[0].mxu0
        %v901 = vpop.f32.mrb[0].mxu0
        %v902 = vadd.f32 %v705, %v901
        %v903 = vpop.f32.mrb[0].mxu0
        %904 = vmatprep.mubr.bf16.mxu0 0
        %905 = vmatmul.mubr.bf16.gmra.mrb[0].mxu0 %v760
        %v906 = vpop.f32.mrb[0].mxu0
        %v907 = vadd.f32 %v705, %v906
        %v908 = vpop.f32.mrb[0].mxu0
        %v909 = vpop.f32.mrb[0].mxu0
        %v910 = vadd.f32 %v705, %v909
        %v911 = vpop.f32.mrb[0].mxu0
        %912 = vmatprep.mubr.bf16.mxu0 0
        %913 = vmatmul.mubr.bf16.gmra.mrb[0].mxu0 %v763
        %v914 = vpop.f32.mrb[0].mxu0
        %v915 = vadd.f32 %v705, %v914
        %v916 = vpop.f32.mrb[0].mxu0
        %v917 = vpop.f32.mrb[0].mxu0
        %v918 = vadd.f32 %v705, %v917
        %v919 = vpop.f32.mrb[0].mxu0
        %920 = vmatprep.mubr.bf16.mxu0 0
        %921 = vmatmul.mubr.bf16.gmra.mrb[0].mxu0 %v766
        %v922 = vpop.f32.mrb[0].mxu0
        %v923 = vadd.f32 %v705, %v922
        %v924 = vpop.f32.mrb[0].mxu0
        %v925 = vpop.f32.mrb[0].mxu0
        %v926 = vadd.f32 %v705, %v925
        %v927 = vpop.f32.mrb[0].mxu0
        %928 = vdwg.mxu0
        %v929 = vmax.f32 %v803, 0.0
        %v930 = vmax.f32 %v806, 0.0
        %v931 = vmax.f32 %v811, 0.0
        %v932 = vmax.f32 %v814, 0.0
        %v933 = vmax.f32 %v819, 0.0
        %v934 = vmax.f32 %v822, 0.0
        %v935 = vmax.f32 %v827, 0.0
        %v936 = vmax.f32 %v830, 0.0
        %v937 = vmax.f32 %v835, 0.0
        %v938 = vmax.f32 %v838, 0.0
        %v939 = vmax.f32 %v843, 0.0
        %v940 = vmax.f32 %v846, 0.0
        %v941 = vmax.f32 %v851, 0.0
        %v942 = vmax.f32 %v854, 0.0
        %v943 = vmax.f32 %v859, 0.0
        %v944 = vmax.f32 %v862, 0.0
        %v945 = vmax.f32 %v867, 0.0
        %v946 = vmax.f32 %v870, 0.0
        %v947 = vmax.f32 %v875, 0.0
        %v948 = vmax.f32 %v878, 0.0
        %v949 = vmax.f32 %v883, 0.0
        %v950 = vmax.f32 %v886, 0.0
        %v951 = vmax.f32 %v891, 0.0
        %v952 = vmax.f32 %v894, 0.0
        %v953 = vmax.f32 %v899, 0.0
        %v954 = vmax.f32 %v902, 0.0
        %v955 = vmax.f32 %v907, 0.0
        %v956 = vmax.f32 %v910, 0.0
        %v957 = vmax.f32 %v915, 0.0
        %v958 = vmax.f32 %v918, 0.0
        %v959 = vmax.f32 %v923, 0.0
        %v960 = vmax.f32 %v926, 0.0
        %v961 = vld [vmem:[%s5] sm:$0x1]
        %v962 = vld [vmem:[#allocation2] sm:$0x1]
        %v963 = vpack.c.bf16 %v930, %v929
        %v964 = vpack.c.bf16 %v932, %v931
        %v965 = vpack.c.bf16 %v934, %v933
        %v966 = vpack.c.bf16 %v936, %v935
        %v967 = vpack.c.bf16 %v938, %v937
        %v968 = vpack.c.bf16 %v940, %v939
        %v969 = vpack.c.bf16 %v942, %v941
        %v970 = vpack.c.bf16 %v944, %v943
        %v971 = vpack.c.bf16 %v946, %v945
        %v972 = vpack.c.bf16 %v948, %v947
        %v973 = vpack.c.bf16 %v950, %v949
        %v974 = vpack.c.bf16 %v952, %v951
        %v975 = vpack.c.bf16 %v954, %v953
        %v976 = vpack.c.bf16 %v956, %v955
        %v977 = vpack.c.bf16 %v958, %v957
        %v978 = vpack.c.bf16 %v960, %v959
        %980 = vset.pattern.permute.xlu0 0
        %981 = vperm.xlu0 %980, %v962
        %v982 = vpop.permute.xlu0 %981
        %v984 = vlaneseq
        %v985 = vshrl.u32 %v984, 7
        %v986 = vsub.s32 0, %v985
        %v987 = vrot.slane %v982, %v986
        %v989 = vsel %vm719, %v961, 0
        %v992 = vsel %vm719, %v963, 0
        %v995 = vsel %vm719, %v964, 0
        %v998 = vsel %vm719, %v965, 0
        %v1001 = vsel %vm719, %v966, 0
        %v1004 = vsel %vm719, %v967, 0
        %v1007 = vsel %vm719, %v968, 0
        %v1010 = vsel %vm719, %v969, 0
        %v1013 = vsel %vm719, %v970, 0
        %v1016 = vsel %vm719, %v971, 0
        %v1019 = vsel %vm719, %v972, 0
        %v1022 = vsel %vm719, %v973, 0
        %v1025 = vsel %vm719, %v974, 0
        %v1028 = vsel %vm719, %v975, 0
        %v1031 = vsel %vm719, %v976, 0
        %v1034 = vsel %vm719, %v977, 0
        %v1037 = vsel %vm719, %v978, 0
        %1039 = vmatprep.subr.bf16.mxu0 0
        %1040 = vmatpush1.bf16.xpose.msra.mxu0 %v992
        %1041 = vmatprep.subr.bf16.mxu0 0
        %1042 = vmatpush1.bf16.xpose.msra.mxu0 %v995
        %1043 = vmatprep.subr.bf16.mxu0 0
        %1044 = vmatpush1.bf16.xpose.msra.mxu0 %v998
        %1045 = vmatprep.subr.bf16.mxu0 0
        %1046 = vmatpush1.bf16.xpose.msra.mxu0 %v1001
        %1047 = vmatprep.subr.bf16.mxu0 0
        %1048 = vmatpush1.bf16.xpose.msra.mxu0 %v1004
        %1049 = vmatprep.subr.bf16.mxu0 0
        %1050 = vmatpush1.bf16.xpose.msra.mxu0 %v1007
        %1051 = vmatprep.subr.bf16.mxu0 0
        %1052 = vmatpush1.bf16.xpose.msra.mxu0 %v1010
        %1053 = vmatprep.subr.bf16.mxu0 0
        %1054 = vmatpush1.bf16.xpose.msra.mxu0 %v1013
        %1055 = vmatprep.subr.bf16.mxu0 0
        %1056 = vmatpush1.bf16.xpose.msra.mxu0 %v1016
        %1057 = vmatprep.subr.bf16.mxu0 0
        %1058 = vmatpush1.bf16.xpose.msra.mxu0 %v1019
        %1059 = vmatprep.subr.bf16.mxu0 0
        %1060 = vmatpush1.bf16.xpose.msra.mxu0 %v1022
        %1061 = vmatprep.subr.bf16.mxu0 0
        %1062 = vmatpush1.bf16.xpose.msra.mxu0 %v1025
        %1063 = vmatprep.subr.bf16.mxu0 0
        %1064 = vmatpush1.bf16.xpose.msra.mxu0 %v1028
        %1065 = vmatprep.subr.bf16.mxu0 0
        %1066 = vmatpush1.bf16.xpose.msra.mxu0 %v1031
        %1067 = vmatprep.subr.bf16.mxu0 0
        %1068 = vmatpush1.bf16.xpose.msra.mxu0 %v1034
        %1069 = vmatprep.subr.bf16.mxu0 0
        %1070 = vmatpush1.bf16.xpose.msra.mxu0 %v1037
        %1071 = vmatprep.mubr.bf16.mxu0 0
        %1072 = vmatmul.mubr.bf16.gmra.mrb[0].mxu0 %v989
        %v1073 = vpop.f32.mrb[0].mxu0
        %v1074 = vadd.f32 %v987, %v1073
        %v1075 = vpop.f32.mrb[0].mxu0
        %v1076 = vadd.f32 %v987, %v1075
        %v1077 = vpop.f32.mrb[0].mxu0
        %v1078 = vpop.f32.mrb[0].mxu0
        %1079 = vdwg.mxu0
        %v1082 = vcombine.low %v1074, %v1076
        %v1084 = vunpack.c.l.s4 1966171168
        %v1085 = vunpack.c.0.s8 %v1084
        %v1086 = vlaneseq
        %v1087 = vshrl.u32 %v1086, 7
        %v1088 = vsub.s32 %v1085, %v1087
        %v1089 = vrot.slane %v1082, %v1088
        %v1091 = vunpack.c.l.s4 1966171168
        %v1092 = vunpack.c.0.s8 %v1091
        %v1093 = vlaneseq
        %v1094 = vshrl.u32 %v1093, 7
        %v1095 = vsub.s32 %v1092, %v1094
        %v1096 = vrot.slane %v1089, %v1095
        %v1098 = vlaneseq
        %vm1099 = vcmp.ge.s32.totalorder %v1098, 0
        %vm1100 = vcmp.lt.s32.totalorder %v1098, 256
        %vm1101 = vmand %vm1099, %vm1100
        %1102 = vst.msk [vmem:[%s286] sm:$0x3] %vm1101, %v1096
        %s1103 = sand.u32 %s183, 1
        %s1104 = scalar_lea.sflag [#allocation4], %s1103
        %s1105 = sand.u32 %s183, 1
        %s1106 = smul.addr %s1105, 2
        %s1107 = scalar_lea.vmem [#allocation3], %s1106
        // Predicated region
        $region49: #{tpu_custom_call.1} parent=47 // pred_check
          %p1108 = pneg %p193
        $region50: #{tpu_custom_call.1} parent=47 // pred_check_branch
          %1110 = sbr.rel (%p1108) target = $region52
        $region51: #{tpu_custom_call.1} parent=47 // pred_region
          %s1111 = smul.u32 2, %s23
          %s1113 = ssub.s32 32, 32
          %1114 = vsyncadd %s1104, %s1113
          %s1115 = smul.addr %s1111, 16
          %s1116 = scalar_lea.hbm %s7, %s1115
          %s1118 = sshll.u32 %s1107, 4
          %s1119 = int_to_ptr.vmem [resolvable:$true] %s1118
          %1121 = dma.vmem_to_hbm [thread:$0]  %s1119, 32, %s1116, %s1104
        $region52: #{tpu_custom_call.1} parent=47 // pred_fallthru
          _
      $region48: #{tpu_custom_call.1} parent=5 // pred_fallthru
        _
      %p1122 = scmp.le.s32.totalorder 2, %s18
      // Predicated region
      $region53: #{tpu_custom_call.1} parent=5 // pred_check
        %p1123 = pneg %p1122
      $region54: #{tpu_custom_call.1} parent=5 // pred_check_branch
        %1125 = sbr.rel (%p1123) target = $region56
      $region55: #{tpu_custom_call.1} parent=5 // pred_region
        %s1126 = ssub.s32 %s18, 2
        // Predicated region
        $region57: #{tpu_custom_call.1} parent=55 // pred_check
          %p1127 = pneg %p199
        $region58: #{tpu_custom_call.1} parent=55 // pred_check_branch
          %1129 = sbr.rel (%p1127) target = $region60
        $region59: #{tpu_custom_call.1} parent=55 // pred_region
          %s1130 = sand.u32 %s184, 1
          %s1131 = scalar_lea.sflag [#allocation4], %s1130
          %s1132 = sand.u32 %s184, 1
          %s1133 = smul.addr %s1132, 2
          %s1134 = scalar_lea.vmem [#allocation3], %s1133
          %1135 = dma.done %s1131, 32
        $region60: #{tpu_custom_call.1} parent=55 // pred_fallthru
          _
      $region56: #{tpu_custom_call.1} parent=5 // pred_fallthru
        _
    $region6: #{tpu_custom_call.1} parent=1 // loop_footer
      %s22 = sadd.s32 1, %s18
    $region7: #{tpu_custom_call.1} parent=1 // loop_footer_branch
      %17 = sbr.rel target = $region3
    $region8: #{tpu_custom_call.1} parent=1 // loop_exit
      _
    %1136 = vsyncpa [#allocation4], 1
    %s1137 = scalar_lea.sflag [#allocation4], 1
    %1138 = vsyncpa %s1137, 1

</llo_original>
